<compile_context>
chip_gen: v6e
topology: v6e:2x2x1
jax: 0.10.0
libtpu: 0.0.40
codegen_flags: <defaults>
</compile_context>

<pallas_src>
import jax
import jax.numpy as jnp
from jax.experimental import pallas as pl
from jax.experimental.pallas import tpu as pltpu


LANE = 128  # TPU lane width; all feature dims are padded to this.


# ----------------------------- Pallas kernel ------------------------------ #

def make_kernel(hidden_widths):
    """hidden_widths = true (unpadded) widths of the 5 LayerNorm'd layers."""
    w1d, w2d, w3d, w4d, w5d = hidden_widths

    def kernel(x_ref, w_ref, vec_ref, o_ref):
        # x_ref:   (TR, 128) f32 embeddings, lanes >= E are zero
        # w_ref:   (7, 128, 128) bf16 packed weights  [w1..w6, w_out]
        # vec_ref: (16, 128) f32 packed vectors       [b1..b6, g1..g5, be1..be5]
        # o_ref:   (TR, 128) f32 logits (lanes >= V are zero / ignored)
        h = x_ref[...]
        vecs = vec_ref[...]          # one load; rows indexed statically below

        def dot_bias(v, wi, bi):
            # bf16 on the MXU path, f32 accumulate, f32 bias add on the VPU.
            return (jnp.dot(v.astype(jnp.bfloat16), w_ref[wi],
                            preferred_element_type=jnp.float32)
                    + vecs[bi:bi + 1, :])

        def mish(v):
            # Mish(x) = x * tanh(softplus(x)); softplus is numerically stable.
            return v * jnp.tanh(jax.nn.softplus(v))

        def layernorm(v, gi, bei, width):
            # Padded lanes of v are exactly 0, so plain lane sums scaled by the
            # true width give the correct mean / E[x^2]; padded gamma/beta are
            # zero, which re-zeroes those lanes on the way out.
            inv_w = 1.0 / float(width)
            mu = jnp.sum(v, axis=-1, keepdims=True) * inv_w
            var = jnp.sum(v * v, axis=-1, keepdims=True) * inv_w - mu * mu
            return ((v - mu) * jax.lax.rsqrt(var + 1e-5)
                    * vecs[gi:gi + 1, :] + vecs[bei:bei + 1, :])

        # ---- encoder ----  (Dropout layers are identity in eval mode)
        h = layernorm(mish(dot_bias(h, 0, 0)), 6, 11, w1d)   # E   -> E/2
        h = layernorm(mish(dot_bias(h, 1, 1)), 7, 12, w2d)   # E/2 -> E/4
        h = layernorm(dot_bias(h, 2, 2), 8, 13, w3d)         # E/4 -> E/8 (no Mish)

        # ---- decoder ----
        h = layernorm(mish(dot_bias(h, 3, 3)), 9, 14, w4d)   # E/8 -> E/4
        h = layernorm(mish(dot_bias(h, 4, 4)), 10, 15, w5d)  # E/4 -> E/2
        h = dot_bias(h, 5, 5)                                # E/2 -> E (no act/LN)

        # ---- output head: Linear(E, V, bias=False), lane-dense store ----
        o_ref[...] = jnp.dot(h.astype(jnp.bfloat16), w_ref[6],
                             preferred_element_type=jnp.float32)

    return kernel


# ------------------------------- wrapper ----------------------------------- #

def _pad2d(a, shape):
    return jnp.pad(a, [(0, shape[0] - a.shape[0]), (0, shape[1] - a.shape[1])])


def _pad1d(a, n):
    return jnp.pad(a.reshape(-1), (0, n - a.size))


def _pick_row_tile(n_rows, cap=256):
    # Big tiles amortize per-grid-step overhead (~0.35 us/step), but keep
    # >= 2 grid steps so both v7x TensorCores get work; row tiles are a
    # multiple of 8 (sublane granularity).
    half = max(1, -(-n_rows // 2))
    half = max(8, ((half + 7) // 8) * 8)
    return min(cap, half)


def run_autoencoder(emb_rows, params):
    """emb_rows: (R, E) float32 embeddings. Returns (R, V) float32 logits."""
    R, E = emb_rows.shape
    V = params["w_out"].shape[1]
    # TODO(synk): tile weights over lanes (extra grid axis) for E or V > 128.
    assert E <= LANE and V <= LANE, "this kernel assumes E, V <= 128"

    dims = [E, E // 2, E // 4, E // 8, E // 4, E // 2, E]
    hidden_widths = (dims[1], dims[2], dims[3], dims[4], dims[5])

    # Pack all weight matrices into one bf16 (7, 128, 128) slab.
    w_names = ["w1", "w2", "w3", "w4", "w5", "w6", "w_out"]
    w_slab = jnp.stack(
        [_pad2d(params[n].astype(jnp.bfloat16), (LANE, LANE)) for n in w_names])

    # Pack all bias / gamma / beta vectors into one f32 (16, 128) slab.
    v_names = ["b1", "b2", "b3", "b4", "b5", "b6",
               "g1", "g2", "g3", "g4", "g5",
               "be1", "be2", "be3", "be4", "be5"]
    vec_slab = jnp.stack([_pad1d(params[n], LANE).astype(jnp.float32)
                          for n in v_names])

    # Pad rows/lanes and pick a large row tile (>= 2 grid steps when possible).
    row_tile = _pick_row_tile(R)
    r_pad = -(-R // row_tile) * row_tile
    x = jnp.zeros((r_pad, LANE), jnp.float32).at[:R, :E].set(emb_rows)

    kernel = make_kernel(hidden_widths)
    out = pl.pallas_call(
        kernel,
        out_shape=jax.ShapeDtypeStruct((r_pad, LANE), jnp.float32),
        grid=(r_pad // row_tile,),
        in_specs=[
            pl.BlockSpec((row_tile, LANE), lambda i: (i, 0)),
            pl.BlockSpec(w_slab.shape, lambda i: (0, 0, 0)),   # resident weights
            pl.BlockSpec(vec_slab.shape, lambda i: (0, 0)),    # resident vectors
        ],
        out_specs=pl.BlockSpec((row_tile, LANE), lambda i: (i, 0)),
        compiler_params=pltpu.CompilerParams(
            dimension_semantics=("parallel",)),
    )(x, w_slab, vec_slab)

    return out[:R, :V]


# ------------------------------- parameters -------------------------------- #

def init_params(key, vocab_size, sequence_len, embedding_size, n_years=14):
    E = embedding_size
    dims = [E, E // 2, E // 4, E // 8, E // 4, E // 2, E]
    keys = jax.random.split(key, 16)
    k = iter(keys)

    def lin(kk, din, dout):
        # weight stored as (in, out) so the kernel does x @ W (== PT x @ W.T)
        w = jax.random.normal(kk, (din, dout), jnp.float32) * (1.0 / jnp.sqrt(din))
        b = jnp.zeros((dout,), jnp.float32)
        return w, b

    p = {}
    # embeddings (SurveyEmbeddings: token / position / year tables)
    p["tok_emb"] = jax.random.normal(next(k), (vocab_size, E), jnp.float32) * 0.02
    p["pos_emb"] = jax.random.normal(next(k), (sequence_len, E), jnp.float32) * 0.02
    p["year_emb"] = jax.random.normal(next(k), (n_years, E), jnp.float32) * 0.02

    # encoder
    p["w1"], p["b1"] = lin(next(k), dims[0], dims[1])
    p["g1"], p["be1"] = jnp.ones((dims[1],), jnp.float32), jnp.zeros((dims[1],), jnp.float32)
    p["w2"], p["b2"] = lin(next(k), dims[1], dims[2])
    p["g2"], p["be2"] = jnp.ones((dims[2],), jnp.float32), jnp.zeros((dims[2],), jnp.float32)
    p["w3"], p["b3"] = lin(next(k), dims[2], dims[3])
    p["g3"], p["be3"] = jnp.ones((dims[3],), jnp.float32), jnp.zeros((dims[3],), jnp.float32)

    # decoder
    p["w4"], p["b4"] = lin(next(k), dims[3], dims[4])
    p["g4"], p["be4"] = jnp.ones((dims[4],), jnp.float32), jnp.zeros((dims[4],), jnp.float32)
    p["w5"], p["b5"] = lin(next(k), dims[4], dims[5])
    p["g5"], p["be5"] = jnp.ones((dims[5],), jnp.float32), jnp.zeros((dims[5],), jnp.float32)
    p["w6"], p["b6"] = lin(next(k), dims[5], dims[6])

    # output head, Linear(E, vocab_size, bias=False)
    p["w_out"], _ = lin(next(k), E, vocab_size)
    return p


def survey_embeddings(params, year, seq):
    """Glue: additive token + position + year embedding (inferred)."""
    B, L = seq.shape
    tok = params["tok_emb"][seq]                    # (B, L, E)
    pos = params["pos_emb"][jnp.arange(L)][None]    # (1, L, E)
    yr = params["year_emb"][year][:, None, :]       # (B, 1, E)
    return tok + pos + yr


def simple_autoencoder_forward(params, year, seq):
    B, L = seq.shape
    emb = survey_embeddings(params, year, seq)      # (B, L, E)
    E = emb.shape[-1]
    rows = emb.reshape(B * L, E)
    logits = run_autoencoder(rows, params)          # (B*L, V)
    V = logits.shape[-1]
    return logits.reshape(B, L, V)


# ---------------------------------- main ----------------------------------- #

if __name__ == "__main__":
    vocab_size = 32
    sequence_len = 8
    embedding_size = 64   # E/8 = 8 — divisible, as the torch module requires
    n_years = 14
    batch = 4

    key = jax.random.PRNGKey(0)
    pkey, ykey, skey = jax.random.split(key, 3)
    params = init_params(pkey, vocab_size, sequence_len, embedding_size, n_years)

    year = jax.random.randint(ykey, (batch,), 0, n_years, dtype=jnp.int32)
    seq = jax.random.randint(skey, (batch, sequence_len), 0, vocab_size,
                             dtype=jnp.int32)

    fwd = jax.jit(simple_autoencoder_forward)
    out = fwd(params, year, seq)
    jax.block_until_ready(out)
    assert out.shape == (batch, sequence_len, vocab_size)
    assert bool(jnp.all(jnp.isfinite(out)))
    print("KERNEL_OK")
</pallas_src>

<mosaic_0001>
module attributes {stable_mosaic.version = 11 : i64} {
  func.func @kernel(%arg0: i32, %arg1: memref<16x128xf32, #tpu.memory_space<vmem>>, %arg2: memref<7x128x128xbf16, #tpu.memory_space<vmem>>, %arg3: memref<16x128xf32, #tpu.memory_space<vmem>>, %arg4: memref<16x128xf32, #tpu.memory_space<vmem>>) attributes {dimension_semantics = [#tpu.dimension_semantics<parallel>], iteration_bounds = array<i64: 2>, scalar_prefetch = 0 : i64, scratch_operands = 0 : i64, tpu.core_type = #tpu.core_type<tc>, window_params = [{transform_indices = @transform_0, window_bounds = array<i64: 16, 128>}, {pipeline_mode = #tpu.pipeline_mode<synchronous>, transform_indices = @transform_1, window_bounds = array<i64: 7, 128, 128>}, {pipeline_mode = #tpu.pipeline_mode<synchronous>, transform_indices = @transform_2, window_bounds = array<i64: 16, 128>}, {transform_indices = @transform_3, window_bounds = array<i64: 16, 128>}]} {
    %c0 = arith.constant 0 : index
    %c0_0 = arith.constant 0 : index
    %0 = vector.load %arg1[%c0, %c0_0] : memref<16x128xf32, #tpu.memory_space<vmem>>, vector<16x128xf32>
    %c0_1 = arith.constant 0 : index
    %c0_2 = arith.constant 0 : index
    %1 = vector.load %arg3[%c0_1, %c0_2] : memref<16x128xf32, #tpu.memory_space<vmem>>, vector<16x128xf32>
    %2 = arith.truncf %0 : vector<16x128xf32> to vector<16x128xbf16>
    %c0_3 = arith.constant 0 : index
    %c0_4 = arith.constant 0 : index
    %c0_5 = arith.constant 0 : index
    %3 = vector.load %arg2[%c0_3, %c0_4, %c0_5] : memref<7x128x128xbf16, #tpu.memory_space<vmem>>, vector<1x128x128xbf16>
    %4 = vector.shape_cast %3 : vector<1x128x128xbf16> to vector<128x128xbf16>
    %cst = arith.constant dense<0.000000e+00> : vector<16x128xf32>
    %5 = tpu.matmul %2, %4, %cst {dimension_numbers = #tpu.dot_dimension_numbers<[1], [0], [0], [1], [0, 0, 1, 1], [], []>} : vector<16x128xbf16>, vector<128x128xbf16>, vector<16x128xf32> -> vector<16x128xf32>
    %6 = vector.extract_strided_slice %1 {offsets = [0, 0], sizes = [1, 128], strides = [1, 1]} : vector<16x128xf32> to vector<1x128xf32>
    %7 = vector.broadcast %6 : vector<1x128xf32> to vector<16x128xf32>
    %8 = arith.addf %5, %7 : vector<16x128xf32>
    %cst_6 = arith.constant 0.000000e+00 : f32
    %9 = vector.broadcast %cst_6 : f32 to vector<16x128xf32>
    %10 = arith.maximumf %8, %9 : vector<16x128xf32>
    %11 = vector.broadcast %cst_6 : f32 to vector<16x128xf32>
    %12 = arith.subf %8, %11 : vector<16x128xf32>
    %13 = arith.cmpf one, %12, %12 : vector<16x128xf32>
    %14 = vector.broadcast %cst_6 : f32 to vector<16x128xf32>
    %15 = arith.addf %8, %14 : vector<16x128xf32>
    %16 = math.absf %12 : vector<16x128xf32>
    %cst_7 = arith.constant 0.000000e+00 : f32
    %17 = vector.broadcast %cst_7 : f32 to vector<16x128xf32>
    %18 = arith.subf %17, %16 : vector<16x128xf32>
    %19 = math.exp %18 : vector<16x128xf32>
    %20 = math.log1p %19 : vector<16x128xf32>
    %21 = arith.addf %10, %20 : vector<16x128xf32>
    %22 = arith.select %13, %15, %21 : vector<16x128xi1>, vector<16x128xf32>
    %23 = math.tanh %22 : vector<16x128xf32>
    %24 = arith.mulf %8, %23 : vector<16x128xf32>
    %cst_8 = arith.constant dense<0.000000e+00> : vector<16xf32>
    %25 = vector.multi_reduction <add>, %24, %cst_8 [1] : vector<16x128xf32> to vector<16xf32>
    %26 = vector.shape_cast %25 : vector<16xf32> to vector<16x1xf32>
    %cst_9 = arith.constant 3.125000e-02 : f32
    %27 = vector.broadcast %cst_9 : f32 to vector<16x1xf32>
    %28 = arith.mulf %26, %27 : vector<16x1xf32>
    %29 = arith.mulf %24, %24 : vector<16x128xf32>
    %cst_10 = arith.constant dense<0.000000e+00> : vector<16xf32>
    %30 = vector.multi_reduction <add>, %29, %cst_10 [1] : vector<16x128xf32> to vector<16xf32>
    %31 = vector.shape_cast %30 : vector<16xf32> to vector<16x1xf32>
    %cst_11 = arith.constant 3.125000e-02 : f32
    %32 = vector.broadcast %cst_11 : f32 to vector<16x1xf32>
    %33 = arith.mulf %31, %32 : vector<16x1xf32>
    %34 = arith.mulf %28, %28 : vector<16x1xf32>
    %35 = arith.subf %33, %34 : vector<16x1xf32>
    %36 = vector.broadcast %28 : vector<16x1xf32> to vector<16x128xf32>
    %37 = arith.subf %24, %36 : vector<16x128xf32>
    %cst_12 = arith.constant 9.99999974E-6 : f32
    %38 = vector.broadcast %cst_12 : f32 to vector<16x1xf32>
    %39 = arith.addf %35, %38 : vector<16x1xf32>
    %40 = math.rsqrt %39 : vector<16x1xf32>
    %41 = vector.broadcast %40 : vector<16x1xf32> to vector<16x128xf32>
    %42 = arith.mulf %37, %41 : vector<16x128xf32>
    %43 = vector.extract_strided_slice %1 {offsets = [6, 0], sizes = [1, 128], strides = [1, 1]} : vector<16x128xf32> to vector<1x128xf32>
    %44 = vector.broadcast %43 : vector<1x128xf32> to vector<16x128xf32>
    %45 = arith.mulf %42, %44 : vector<16x128xf32>
    %46 = vector.extract_strided_slice %1 {offsets = [11, 0], sizes = [1, 128], strides = [1, 1]} : vector<16x128xf32> to vector<1x128xf32>
    %47 = vector.broadcast %46 : vector<1x128xf32> to vector<16x128xf32>
    %48 = arith.addf %45, %47 : vector<16x128xf32>
    %49 = arith.truncf %48 : vector<16x128xf32> to vector<16x128xbf16>
    %c1 = arith.constant 1 : index
    %c0_13 = arith.constant 0 : index
    %c0_14 = arith.constant 0 : index
    %50 = vector.load %arg2[%c1, %c0_13, %c0_14] : memref<7x128x128xbf16, #tpu.memory_space<vmem>>, vector<1x128x128xbf16>
    %51 = vector.shape_cast %50 : vector<1x128x128xbf16> to vector<128x128xbf16>
    %cst_15 = arith.constant dense<0.000000e+00> : vector<16x128xf32>
    %52 = tpu.matmul %49, %51, %cst_15 {dimension_numbers = #tpu.dot_dimension_numbers<[1], [0], [0], [1], [0, 0, 1, 1], [], []>} : vector<16x128xbf16>, vector<128x128xbf16>, vector<16x128xf32> -> vector<16x128xf32>
    %53 = vector.extract_strided_slice %1 {offsets = [1, 0], sizes = [1, 128], strides = [1, 1]} : vector<16x128xf32> to vector<1x128xf32>
    %54 = vector.broadcast %53 : vector<1x128xf32> to vector<16x128xf32>
    %55 = arith.addf %52, %54 : vector<16x128xf32>
    %cst_16 = arith.constant 0.000000e+00 : f32
    %56 = vector.broadcast %cst_16 : f32 to vector<16x128xf32>
    %57 = arith.maximumf %55, %56 : vector<16x128xf32>
    %58 = vector.broadcast %cst_16 : f32 to vector<16x128xf32>
    %59 = arith.subf %55, %58 : vector<16x128xf32>
    %60 = arith.cmpf one, %59, %59 : vector<16x128xf32>
    %61 = vector.broadcast %cst_16 : f32 to vector<16x128xf32>
    %62 = arith.addf %55, %61 : vector<16x128xf32>
    %63 = math.absf %59 : vector<16x128xf32>
    %cst_17 = arith.constant 0.000000e+00 : f32
    %64 = vector.broadcast %cst_17 : f32 to vector<16x128xf32>
    %65 = arith.subf %64, %63 : vector<16x128xf32>
    %66 = math.exp %65 : vector<16x128xf32>
    %67 = math.log1p %66 : vector<16x128xf32>
    %68 = arith.addf %57, %67 : vector<16x128xf32>
    %69 = arith.select %60, %62, %68 : vector<16x128xi1>, vector<16x128xf32>
    %70 = math.tanh %69 : vector<16x128xf32>
    %71 = arith.mulf %55, %70 : vector<16x128xf32>
    %cst_18 = arith.constant dense<0.000000e+00> : vector<16xf32>
    %72 = vector.multi_reduction <add>, %71, %cst_18 [1] : vector<16x128xf32> to vector<16xf32>
    %73 = vector.shape_cast %72 : vector<16xf32> to vector<16x1xf32>
    %cst_19 = arith.constant 6.250000e-02 : f32
    %74 = vector.broadcast %cst_19 : f32 to vector<16x1xf32>
    %75 = arith.mulf %73, %74 : vector<16x1xf32>
    %76 = arith.mulf %71, %71 : vector<16x128xf32>
    %cst_20 = arith.constant dense<0.000000e+00> : vector<16xf32>
    %77 = vector.multi_reduction <add>, %76, %cst_20 [1] : vector<16x128xf32> to vector<16xf32>
    %78 = vector.shape_cast %77 : vector<16xf32> to vector<16x1xf32>
    %cst_21 = arith.constant 6.250000e-02 : f32
    %79 = vector.broadcast %cst_21 : f32 to vector<16x1xf32>
    %80 = arith.mulf %78, %79 : vector<16x1xf32>
    %81 = arith.mulf %75, %75 : vector<16x1xf32>
    %82 = arith.subf %80, %81 : vector<16x1xf32>
    %83 = vector.broadcast %75 : vector<16x1xf32> to vector<16x128xf32>
    %84 = arith.subf %71, %83 : vector<16x128xf32>
    %cst_22 = arith.constant 9.99999974E-6 : f32
    %85 = vector.broadcast %cst_22 : f32 to vector<16x1xf32>
    %86 = arith.addf %82, %85 : vector<16x1xf32>
    %87 = math.rsqrt %86 : vector<16x1xf32>
    %88 = vector.broadcast %87 : vector<16x1xf32> to vector<16x128xf32>
    %89 = arith.mulf %84, %88 : vector<16x128xf32>
    %90 = vector.extract_strided_slice %1 {offsets = [7, 0], sizes = [1, 128], strides = [1, 1]} : vector<16x128xf32> to vector<1x128xf32>
    %91 = vector.broadcast %90 : vector<1x128xf32> to vector<16x128xf32>
    %92 = arith.mulf %89, %91 : vector<16x128xf32>
    %93 = vector.extract_strided_slice %1 {offsets = [12, 0], sizes = [1, 128], strides = [1, 1]} : vector<16x128xf32> to vector<1x128xf32>
    %94 = vector.broadcast %93 : vector<1x128xf32> to vector<16x128xf32>
    %95 = arith.addf %92, %94 : vector<16x128xf32>
    %96 = arith.truncf %95 : vector<16x128xf32> to vector<16x128xbf16>
    %c2 = arith.constant 2 : index
    %c0_23 = arith.constant 0 : index
    %c0_24 = arith.constant 0 : index
    %97 = vector.load %arg2[%c2, %c0_23, %c0_24] : memref<7x128x128xbf16, #tpu.memory_space<vmem>>, vector<1x128x128xbf16>
    %98 = vector.shape_cast %97 : vector<1x128x128xbf16> to vector<128x128xbf16>
    %cst_25 = arith.constant dense<0.000000e+00> : vector<16x128xf32>
    %99 = tpu.matmul %96, %98, %cst_25 {dimension_numbers = #tpu.dot_dimension_numbers<[1], [0], [0], [1], [0, 0, 1, 1], [], []>} : vector<16x128xbf16>, vector<128x128xbf16>, vector<16x128xf32> -> vector<16x128xf32>
    %100 = vector.extract_strided_slice %1 {offsets = [2, 0], sizes = [1, 128], strides = [1, 1]} : vector<16x128xf32> to vector<1x128xf32>
    %101 = vector.broadcast %100 : vector<1x128xf32> to vector<16x128xf32>
    %102 = arith.addf %99, %101 : vector<16x128xf32>
    %cst_26 = arith.constant dense<0.000000e+00> : vector<16xf32>
    %103 = vector.multi_reduction <add>, %102, %cst_26 [1] : vector<16x128xf32> to vector<16xf32>
    %104 = vector.shape_cast %103 : vector<16xf32> to vector<16x1xf32>
    %cst_27 = arith.constant 1.250000e-01 : f32
    %105 = vector.broadcast %cst_27 : f32 to vector<16x1xf32>
    %106 = arith.mulf %104, %105 : vector<16x1xf32>
    %107 = arith.mulf %102, %102 : vector<16x128xf32>
    %cst_28 = arith.constant dense<0.000000e+00> : vector<16xf32>
    %108 = vector.multi_reduction <add>, %107, %cst_28 [1] : vector<16x128xf32> to vector<16xf32>
    %109 = vector.shape_cast %108 : vector<16xf32> to vector<16x1xf32>
    %cst_29 = arith.constant 1.250000e-01 : f32
    %110 = vector.broadcast %cst_29 : f32 to vector<16x1xf32>
    %111 = arith.mulf %109, %110 : vector<16x1xf32>
    %112 = arith.mulf %106, %106 : vector<16x1xf32>
    %113 = arith.subf %111, %112 : vector<16x1xf32>
    %114 = vector.broadcast %106 : vector<16x1xf32> to vector<16x128xf32>
    %115 = arith.subf %102, %114 : vector<16x128xf32>
    %cst_30 = arith.constant 9.99999974E-6 : f32
    %116 = vector.broadcast %cst_30 : f32 to vector<16x1xf32>
    %117 = arith.addf %113, %116 : vector<16x1xf32>
    %118 = math.rsqrt %117 : vector<16x1xf32>
    %119 = vector.broadcast %118 : vector<16x1xf32> to vector<16x128xf32>
    %120 = arith.mulf %115, %119 : vector<16x128xf32>
    %121 = vector.extract_strided_slice %1 {offsets = [8, 0], sizes = [1, 128], strides = [1, 1]} : vector<16x128xf32> to vector<1x128xf32>
    %122 = vector.broadcast %121 : vector<1x128xf32> to vector<16x128xf32>
    %123 = arith.mulf %120, %122 : vector<16x128xf32>
    %124 = vector.extract_strided_slice %1 {offsets = [13, 0], sizes = [1, 128], strides = [1, 1]} : vector<16x128xf32> to vector<1x128xf32>
    %125 = vector.broadcast %124 : vector<1x128xf32> to vector<16x128xf32>
    %126 = arith.addf %123, %125 : vector<16x128xf32>
    %127 = arith.truncf %126 : vector<16x128xf32> to vector<16x128xbf16>
    %c3 = arith.constant 3 : index
    %c0_31 = arith.constant 0 : index
    %c0_32 = arith.constant 0 : index
    %128 = vector.load %arg2[%c3, %c0_31, %c0_32] : memref<7x128x128xbf16, #tpu.memory_space<vmem>>, vector<1x128x128xbf16>
    %129 = vector.shape_cast %128 : vector<1x128x128xbf16> to vector<128x128xbf16>
    %cst_33 = arith.constant dense<0.000000e+00> : vector<16x128xf32>
    %130 = tpu.matmul %127, %129, %cst_33 {dimension_numbers = #tpu.dot_dimension_numbers<[1], [0], [0], [1], [0, 0, 1, 1], [], []>} : vector<16x128xbf16>, vector<128x128xbf16>, vector<16x128xf32> -> vector<16x128xf32>
    %131 = vector.extract_strided_slice %1 {offsets = [3, 0], sizes = [1, 128], strides = [1, 1]} : vector<16x128xf32> to vector<1x128xf32>
    %132 = vector.broadcast %131 : vector<1x128xf32> to vector<16x128xf32>
    %133 = arith.addf %130, %132 : vector<16x128xf32>
    %cst_34 = arith.constant 0.000000e+00 : f32
    %134 = vector.broadcast %cst_34 : f32 to vector<16x128xf32>
    %135 = arith.maximumf %133, %134 : vector<16x128xf32>
    %136 = vector.broadcast %cst_34 : f32 to vector<16x128xf32>
    %137 = arith.subf %133, %136 : vector<16x128xf32>
    %138 = arith.cmpf one, %137, %137 : vector<16x128xf32>
    %139 = vector.broadcast %cst_34 : f32 to vector<16x128xf32>
    %140 = arith.addf %133, %139 : vector<16x128xf32>
    %141 = math.absf %137 : vector<16x128xf32>
    %cst_35 = arith.constant 0.000000e+00 : f32
    %142 = vector.broadcast %cst_35 : f32 to vector<16x128xf32>
    %143 = arith.subf %142, %141 : vector<16x128xf32>
    %144 = math.exp %143 : vector<16x128xf32>
    %145 = math.log1p %144 : vector<16x128xf32>
    %146 = arith.addf %135, %145 : vector<16x128xf32>
    %147 = arith.select %138, %140, %146 : vector<16x128xi1>, vector<16x128xf32>
    %148 = math.tanh %147 : vector<16x128xf32>
    %149 = arith.mulf %133, %148 : vector<16x128xf32>
    %cst_36 = arith.constant dense<0.000000e+00> : vector<16xf32>
    %150 = vector.multi_reduction <add>, %149, %cst_36 [1] : vector<16x128xf32> to vector<16xf32>
    %151 = vector.shape_cast %150 : vector<16xf32> to vector<16x1xf32>
    %cst_37 = arith.constant 6.250000e-02 : f32
    %152 = vector.broadcast %cst_37 : f32 to vector<16x1xf32>
    %153 = arith.mulf %151, %152 : vector<16x1xf32>
    %154 = arith.mulf %149, %149 : vector<16x128xf32>
    %cst_38 = arith.constant dense<0.000000e+00> : vector<16xf32>
    %155 = vector.multi_reduction <add>, %154, %cst_38 [1] : vector<16x128xf32> to vector<16xf32>
    %156 = vector.shape_cast %155 : vector<16xf32> to vector<16x1xf32>
    %cst_39 = arith.constant 6.250000e-02 : f32
    %157 = vector.broadcast %cst_39 : f32 to vector<16x1xf32>
    %158 = arith.mulf %156, %157 : vector<16x1xf32>
    %159 = arith.mulf %153, %153 : vector<16x1xf32>
    %160 = arith.subf %158, %159 : vector<16x1xf32>
    %161 = vector.broadcast %153 : vector<16x1xf32> to vector<16x128xf32>
    %162 = arith.subf %149, %161 : vector<16x128xf32>
    %cst_40 = arith.constant 9.99999974E-6 : f32
    %163 = vector.broadcast %cst_40 : f32 to vector<16x1xf32>
    %164 = arith.addf %160, %163 : vector<16x1xf32>
    %165 = math.rsqrt %164 : vector<16x1xf32>
    %166 = vector.broadcast %165 : vector<16x1xf32> to vector<16x128xf32>
    %167 = arith.mulf %162, %166 : vector<16x128xf32>
    %168 = vector.extract_strided_slice %1 {offsets = [9, 0], sizes = [1, 128], strides = [1, 1]} : vector<16x128xf32> to vector<1x128xf32>
    %169 = vector.broadcast %168 : vector<1x128xf32> to vector<16x128xf32>
    %170 = arith.mulf %167, %169 : vector<16x128xf32>
    %171 = vector.extract_strided_slice %1 {offsets = [14, 0], sizes = [1, 128], strides = [1, 1]} : vector<16x128xf32> to vector<1x128xf32>
    %172 = vector.broadcast %171 : vector<1x128xf32> to vector<16x128xf32>
    %173 = arith.addf %170, %172 : vector<16x128xf32>
    %174 = arith.truncf %173 : vector<16x128xf32> to vector<16x128xbf16>
    %c4 = arith.constant 4 : index
    %c0_41 = arith.constant 0 : index
    %c0_42 = arith.constant 0 : index
    %175 = vector.load %arg2[%c4, %c0_41, %c0_42] : memref<7x128x128xbf16, #tpu.memory_space<vmem>>, vector<1x128x128xbf16>
    %176 = vector.shape_cast %175 : vector<1x128x128xbf16> to vector<128x128xbf16>
    %cst_43 = arith.constant dense<0.000000e+00> : vector<16x128xf32>
    %177 = tpu.matmul %174, %176, %cst_43 {dimension_numbers = #tpu.dot_dimension_numbers<[1], [0], [0], [1], [0, 0, 1, 1], [], []>} : vector<16x128xbf16>, vector<128x128xbf16>, vector<16x128xf32> -> vector<16x128xf32>
    %178 = vector.extract_strided_slice %1 {offsets = [4, 0], sizes = [1, 128], strides = [1, 1]} : vector<16x128xf32> to vector<1x128xf32>
    %179 = vector.broadcast %178 : vector<1x128xf32> to vector<16x128xf32>
    %180 = arith.addf %177, %179 : vector<16x128xf32>
    %cst_44 = arith.constant 0.000000e+00 : f32
    %181 = vector.broadcast %cst_44 : f32 to vector<16x128xf32>
    %182 = arith.maximumf %180, %181 : vector<16x128xf32>
    %183 = vector.broadcast %cst_44 : f32 to vector<16x128xf32>
    %184 = arith.subf %180, %183 : vector<16x128xf32>
    %185 = arith.cmpf one, %184, %184 : vector<16x128xf32>
    %186 = vector.broadcast %cst_44 : f32 to vector<16x128xf32>
    %187 = arith.addf %180, %186 : vector<16x128xf32>
    %188 = math.absf %184 : vector<16x128xf32>
    %cst_45 = arith.constant 0.000000e+00 : f32
    %189 = vector.broadcast %cst_45 : f32 to vector<16x128xf32>
    %190 = arith.subf %189, %188 : vector<16x128xf32>
    %191 = math.exp %190 : vector<16x128xf32>
    %192 = math.log1p %191 : vector<16x128xf32>
    %193 = arith.addf %182, %192 : vector<16x128xf32>
    %194 = arith.select %185, %187, %193 : vector<16x128xi1>, vector<16x128xf32>
    %195 = math.tanh %194 : vector<16x128xf32>
    %196 = arith.mulf %180, %195 : vector<16x128xf32>
    %cst_46 = arith.constant dense<0.000000e+00> : vector<16xf32>
    %197 = vector.multi_reduction <add>, %196, %cst_46 [1] : vector<16x128xf32> to vector<16xf32>
    %198 = vector.shape_cast %197 : vector<16xf32> to vector<16x1xf32>
    %cst_47 = arith.constant 3.125000e-02 : f32
    %199 = vector.broadcast %cst_47 : f32 to vector<16x1xf32>
    %200 = arith.mulf %198, %199 : vector<16x1xf32>
    %201 = arith.mulf %196, %196 : vector<16x128xf32>
    %cst_48 = arith.constant dense<0.000000e+00> : vector<16xf32>
    %202 = vector.multi_reduction <add>, %201, %cst_48 [1] : vector<16x128xf32> to vector<16xf32>
    %203 = vector.shape_cast %202 : vector<16xf32> to vector<16x1xf32>
    %cst_49 = arith.constant 3.125000e-02 : f32
    %204 = vector.broadcast %cst_49 : f32 to vector<16x1xf32>
    %205 = arith.mulf %203, %204 : vector<16x1xf32>
    %206 = arith.mulf %200, %200 : vector<16x1xf32>
    %207 = arith.subf %205, %206 : vector<16x1xf32>
    %208 = vector.broadcast %200 : vector<16x1xf32> to vector<16x128xf32>
    %209 = arith.subf %196, %208 : vector<16x128xf32>
    %cst_50 = arith.constant 9.99999974E-6 : f32
    %210 = vector.broadcast %cst_50 : f32 to vector<16x1xf32>
    %211 = arith.addf %207, %210 : vector<16x1xf32>
    %212 = math.rsqrt %211 : vector<16x1xf32>
    %213 = vector.broadcast %212 : vector<16x1xf32> to vector<16x128xf32>
    %214 = arith.mulf %209, %213 : vector<16x128xf32>
    %215 = vector.extract_strided_slice %1 {offsets = [10, 0], sizes = [1, 128], strides = [1, 1]} : vector<16x128xf32> to vector<1x128xf32>
    %216 = vector.broadcast %215 : vector<1x128xf32> to vector<16x128xf32>
    %217 = arith.mulf %214, %216 : vector<16x128xf32>
    %218 = vector.extract_strided_slice %1 {offsets = [15, 0], sizes = [1, 128], strides = [1, 1]} : vector<16x128xf32> to vector<1x128xf32>
    %219 = vector.broadcast %218 : vector<1x128xf32> to vector<16x128xf32>
    %220 = arith.addf %217, %219 : vector<16x128xf32>
    %221 = arith.truncf %220 : vector<16x128xf32> to vector<16x128xbf16>
    %c5 = arith.constant 5 : index
    %c0_51 = arith.constant 0 : index
    %c0_52 = arith.constant 0 : index
    %222 = vector.load %arg2[%c5, %c0_51, %c0_52] : memref<7x128x128xbf16, #tpu.memory_space<vmem>>, vector<1x128x128xbf16>
    %223 = vector.shape_cast %222 : vector<1x128x128xbf16> to vector<128x128xbf16>
    %cst_53 = arith.constant dense<0.000000e+00> : vector<16x128xf32>
    %224 = tpu.matmul %221, %223, %cst_53 {dimension_numbers = #tpu.dot_dimension_numbers<[1], [0], [0], [1], [0, 0, 1, 1], [], []>} : vector<16x128xbf16>, vector<128x128xbf16>, vector<16x128xf32> -> vector<16x128xf32>
    %225 = vector.extract_strided_slice %1 {offsets = [5, 0], sizes = [1, 128], strides = [1, 1]} : vector<16x128xf32> to vector<1x128xf32>
    %226 = vector.broadcast %225 : vector<1x128xf32> to vector<16x128xf32>
    %227 = arith.addf %224, %226 : vector<16x128xf32>
    %228 = arith.truncf %227 : vector<16x128xf32> to vector<16x128xbf16>
    %c6 = arith.constant 6 : index
    %c0_54 = arith.constant 0 : index
    %c0_55 = arith.constant 0 : index
    %229 = vector.load %arg2[%c6, %c0_54, %c0_55] : memref<7x128x128xbf16, #tpu.memory_space<vmem>>, vector<1x128x128xbf16>
    %230 = vector.shape_cast %229 : vector<1x128x128xbf16> to vector<128x128xbf16>
    %cst_56 = arith.constant dense<0.000000e+00> : vector<16x128xf32>
    %231 = tpu.matmul %228, %230, %cst_56 {dimension_numbers = #tpu.dot_dimension_numbers<[1], [0], [0], [1], [0, 0, 1, 1], [], []>} : vector<16x128xbf16>, vector<128x128xbf16>, vector<16x128xf32> -> vector<16x128xf32>
    %c0_57 = arith.constant 0 : index
    %c0_58 = arith.constant 0 : index
    %232 = vector.load %arg4[%c0_57, %c0_58] : memref<16x128xf32, #tpu.memory_space<vmem>>, vector<16x128xf32>
    tpu.vector_store %arg4[%c0_57, %c0_58], %231 {strides = array<i32>} : memref<16x128xf32, #tpu.memory_space<vmem>>, vector<16x128xf32>,
    return
  }
  func.func @transform_0(%arg0: i32) -> (i32, i32) {
    %c0_i32 = arith.constant 0 : i32
    %c0_i32_0 = arith.constant 0 : i32
    return %arg0, %c0_i32 : i32, i32
  }
  func.func @transform_1(%arg0: i32) -> (i32, i32, i32) {
    %c0_i32 = arith.constant 0 : i32
    %c0_i32_0 = arith.constant 0 : i32
    %c0_i32_1 = arith.constant 0 : i32
    %c0_i32_2 = arith.constant 0 : i32
    return %c0_i32, %c0_i32_0, %c0_i32_1 : i32, i32, i32
  }
  func.func @transform_2(%arg0: i32) -> (i32, i32) {
    %c0_i32 = arith.constant 0 : i32
    %c0_i32_0 = arith.constant 0 : i32
    %c0_i32_1 = arith.constant 0 : i32
    return %c0_i32, %c0_i32_0 : i32, i32
  }
  func.func @transform_3(%arg0: i32) -> (i32, i32) {
    %c0_i32 = arith.constant 0 : i32
    %c0_i32_0 = arith.constant 0 : i32
    return %arg0, %c0_i32 : i32, i32
  }
}

</mosaic_0001>

<llo_original>
// kernel: simple_autoencoder_forward.1
$region0: #{simple_autoencoder_forward.1}
  #allocation0 [shape = 'u32[]', space=smem, size = 0x4, offset = 0x4, fixed_abs, tag = 'smem constant byte address 0x4 - core index']
  #allocation1 [shape = 'u32[144,128]{1,0:T(1,128)}', space=vmem, size = 0x12000, scoped, tag = 'internal scratch']
  %s0 = inlined_call_operand.vmem [shape: f32[32,128], index: 0, kind: input, shape index: {}]
  %s1 = inlined_call_operand.vmem [shape: bf16[7,128,128], index: 1, kind: input, shape index: {}]
  %s2 = inlined_call_operand.vmem [shape: f32[16,128], index: 2, kind: input, shape index: {}]
  %s3 = inlined_call_operand.vmem [shape: f32[32,128], index: 3, kind: output, shape index: {}]
  %s4 = sld [smem:[#allocation0]]
  $region45: #{simple_autoencoder_forward.1} parent=0
    _
  %s6 = ssub.s32 1, %s4
  %s7 = scalar_select 0, %s6, %s4
  loop: start=0, step=1, limit=4
  $region2: #{simple_autoencoder_forward.1} parent=0 // loop_pre_header
    _
  $region3: #{simple_autoencoder_forward.1} parent=0 // loop_header
    %s9 = sphi 0, %s13
    %p10 = scmp.ge.s32.totalorder %s9, 4
    %s19 = sphi 0, %s21
    %s22 = sphi 0, %s19
    %s23 = sphi 0, %s22
    %s39 = sphi 0, %s23
    %s43 = sphi 0, %s43
    %s45 = sphi 0, %s43
    %s46 = sphi 0, %s45
    %s60 = sphi 0, %s46
    %s64 = sphi 0, %s64
    %s66 = sphi 0, %s64
    %s67 = sphi 0, %s66
    %s81 = sphi 0, %s67
    %s87 = sphi 0, %s89
    %s90 = sphi 0, %s87
    %s91 = sphi 0, %s90
    %s107 = sphi 0, %s91
  $region4: #{simple_autoencoder_forward.1} parent=0 // loop_header_branch
    %12 = sbr.rel (%p10) target = $region8
  $region5: #{simple_autoencoder_forward.1} parent=0 // loop_body
    %s14 = ssub.s32 %s9, 1
    %s15 = ssub.s32 %s9, 2
    %s16 = sadd.s32 %s9, 1
    %s17 = ssub.s32 %s9, %s16
    %p18 = scmp.eq.s32.totalorder %s17, 0
    %s20 = sadd.s32 %s19, 1
    %s21 = scalar_select %p18, %s19, %s20
    %p24 = pneg %p18
    %p25 = scmp.eq.s32.totalorder %s9, 1
    %p26 = por %p24, %p25
    %p27 = scmp.ne.s32.totalorder %s19, %s22
    %p28 = scmp.eq.s32.totalorder %s9, 0
    %p29 = por %p27, %p28
    %p30 = scmp.ne.s32.totalorder %s19, %s22
    %p31 = scmp.eq.s32.totalorder %s14, 1
    %p32 = por %p30, %p31
    %p33 = scmp.ne.s32.totalorder %s22, %s23
    %p34 = scmp.eq.s32.totalorder %s14, 0
    %p35 = por %p33, %p34
    %p36 = scmp.ne.s32.totalorder %s22, %s23
    %p37 = scmp.eq.s32.totalorder %s15, 1
    %p38 = por %p36, %p37
    %p40 = scmp.ne.s32.totalorder %s23, %s39
    %p41 = scmp.eq.s32.totalorder %s15, 0
    %p42 = por %p40, %p41
    %s44 = sadd.s32 %s43, 1
    %p47 = scmp.eq.s32.totalorder %s9, 1
    %p48 = scmp.ne.s32.totalorder %s43, %s45
    %p49 = scmp.eq.s32.totalorder %s9, 0
    %p50 = por %p48, %p49
    %p51 = scmp.ne.s32.totalorder %s43, %s45
    %p52 = scmp.eq.s32.totalorder %s14, 1
    %p53 = por %p51, %p52
    %p54 = scmp.ne.s32.totalorder %s45, %s46
    %p55 = scmp.eq.s32.totalorder %s14, 0
    %p56 = por %p54, %p55
    %p57 = scmp.ne.s32.totalorder %s45, %s46
    %p58 = scmp.eq.s32.totalorder %s15, 1
    %p59 = por %p57, %p58
    %p61 = scmp.ne.s32.totalorder %s46, %s60
    %p62 = scmp.eq.s32.totalorder %s15, 0
    %p63 = por %p61, %p62
    %s65 = sadd.s32 %s64, 1
    %p68 = scmp.eq.s32.totalorder %s9, 1
    %p69 = scmp.ne.s32.totalorder %s64, %s66
    %p70 = scmp.eq.s32.totalorder %s9, 0
    %p71 = por %p69, %p70
    %p72 = scmp.ne.s32.totalorder %s64, %s66
    %p73 = scmp.eq.s32.totalorder %s14, 1
    %p74 = por %p72, %p73
    %p75 = scmp.ne.s32.totalorder %s66, %s67
    %p76 = scmp.eq.s32.totalorder %s14, 0
    %p77 = por %p75, %p76
    %p78 = scmp.ne.s32.totalorder %s66, %s67
    %p79 = scmp.eq.s32.totalorder %s15, 1
    %p80 = por %p78, %p79
    %p82 = scmp.ne.s32.totalorder %s67, %s81
    %p83 = scmp.eq.s32.totalorder %s15, 0
    %p84 = por %p82, %p83
    %s85 = ssub.s32 %s9, %s16
    %p86 = scmp.eq.s32.totalorder %s85, 0
    %s88 = sadd.s32 %s87, 1
    %s89 = scalar_select %p86, %s87, %s88
    %p92 = pneg %p86
    %p93 = scmp.eq.s32.totalorder %s9, 1
    %p94 = por %p92, %p93
    %p95 = scmp.ne.s32.totalorder %s87, %s90
    %p96 = scmp.eq.s32.totalorder %s9, 0
    %p97 = por %p95, %p96
    %p98 = scmp.ne.s32.totalorder %s87, %s90
    %p99 = scmp.eq.s32.totalorder %s14, 1
    %p100 = por %p98, %p99
    %p101 = scmp.ne.s32.totalorder %s90, %s91
    %p102 = scmp.eq.s32.totalorder %s14, 0
    %p103 = por %p101, %p102
    %p104 = scmp.ne.s32.totalorder %s90, %s91
    %p105 = scmp.eq.s32.totalorder %s15, 1
    %p106 = por %p104, %p105
    %p108 = scmp.ne.s32.totalorder %s91, %s107
    %p109 = scmp.eq.s32.totalorder %s15, 0
    %p110 = por %p108, %p109
    %p111 = scmp.le.s32.totalorder 1, %s9
    %p112 = scmp.lt.s32.totalorder %s9, 3
    %p113 = pnand %p111, %p112
    %p114 = pneg %p113
    // Predicated region
    $region9: #{simple_autoencoder_forward.1} parent=5 // pred_check
      _
    $region10: #{simple_autoencoder_forward.1} parent=5 // pred_check_branch
      %116 = sbr.rel (%p113) target = $region12
    $region11: #{simple_autoencoder_forward.1} parent=5 // pred_region
      %s117 = ssub.s32 %s9, 1
      // Predicated region
      $region13: #{simple_autoencoder_forward.1} parent=11 // pred_check
        %p118 = pneg %p56
      $region14: #{simple_autoencoder_forward.1} parent=11 // pred_check_branch
        %120 = sbr.rel (%p118) target = $region16
      $region15: #{simple_autoencoder_forward.1} parent=11 // pred_region
        _
      $region16: #{simple_autoencoder_forward.1} parent=11 // pred_fallthru
        _
      // Predicated region
      $region17: #{simple_autoencoder_forward.1} parent=11 // pred_check
        %p121 = pneg %p77
      $region18: #{simple_autoencoder_forward.1} parent=11 // pred_check_branch
        %123 = sbr.rel (%p121) target = $region20
      $region19: #{simple_autoencoder_forward.1} parent=11 // pred_region
        _
      $region20: #{simple_autoencoder_forward.1} parent=11 // pred_fallthru
        _
    $region12: #{simple_autoencoder_forward.1} parent=5 // pred_fallthru
      _
    %p124 = scmp.lt.s32.totalorder %s9, 2
    // Predicated region
    $region21: #{simple_autoencoder_forward.1} parent=5 // pred_check
      %p125 = pneg %p124
    $region22: #{simple_autoencoder_forward.1} parent=5 // pred_check_branch
      %127 = sbr.rel (%p125) target = $region24
    $region23: #{simple_autoencoder_forward.1} parent=5 // pred_region
      // Predicated region
      $region25: #{simple_autoencoder_forward.1} parent=23 // pred_check
        %p128 = pneg %p29
      $region26: #{simple_autoencoder_forward.1} parent=23 // pred_check_branch
        %130 = sbr.rel (%p128) target = $region28
      $region27: #{simple_autoencoder_forward.1} parent=23 // pred_region
        %s131 = smul.u32 2, %s9
        %p132 = scmp.lt.s32.totalorder %s131, 3
        %s133 = scalar_select %p132, %s131, 3
        %s134 = smul.addr %s133, 8
        %s135 = scalar_lea.vmem %s0, %s134
        %s136 = smul.u32 2, %s9
      $region28: #{simple_autoencoder_forward.1} parent=23 // pred_fallthru
        _
    $region24: #{simple_autoencoder_forward.1} parent=5 // pred_fallthru
      _
    %p137 = scmp.le.s32.totalorder 1, %s9
    %p138 = scmp.lt.s32.totalorder %s9, 3
    %p139 = pnand %p137, %p138
    %p140 = pneg %p139
    // Predicated region
    $region29: #{simple_autoencoder_forward.1} parent=5 // pred_check
      _
    $region30: #{simple_autoencoder_forward.1} parent=5 // pred_check_branch
      %142 = sbr.rel (%p139) target = $region32
    $region31: #{simple_autoencoder_forward.1} parent=5 // pred_region
      %s143 = ssub.s32 %s9, 1
      %s144 = smul.u32 2, %s14
      %p145 = scmp.lt.s32.totalorder %s144, 3
      %s146 = scalar_select %p145, %s144, 3
      %s147 = smul.addr %s146, 8
      %s148 = scalar_lea.vmem %s0, %s147
      %p149 = pneg %p35
      %p150 = pneg %p32
      %p151 = pneg %p56
      %p152 = pneg %p53
      %p153 = pneg %p77
      %p154 = pneg %p74
      %p155 = pneg %p103
      %p156 = pneg %p100
      %s157 = smul.u32 2, %s14
      %p158 = scmp.lt.s32.totalorder %s157, 3
      %s159 = scalar_select %p158, %s157, 3
      %s160 = smul.addr %s159, 8
      %s161 = scalar_lea.vmem %s3, %s160
      %s162 = smul.u32 2, %s14
      %p163 = scmp.lt.s32.totalorder %s162, 3
      %s164 = scalar_select %p163, %s162, 3
      %s165 = smul.addr %s164, 8
      %s166 = scalar_lea.vmem %s0, %s165
      %s167 = smul.u32 2, %s14
      %s168 = smul.u32 2, %s14
      %p169 = scmp.lt.s32.totalorder %s168, 3
      %s170 = scalar_select %p169, %s168, 3
      %s171 = smul.addr %s170, 8
      %s172 = scalar_lea.vmem %s3, %s171
      %s173 = smul.u32 2, %s14
      %v175 = vld [vmem:[%s166] sm:$0xff]
      %v176 = vld [vmem:[%s166 + $0x8] sm:$0xff]
      %v177 = vld [vmem:[%s2] sm:$0xff]
      %v178 = vld [vmem:[%s2 + $0x8] sm:$0xff]
      %v179 = vpack.c.bf16 %v176, %v175
      %v180 = vld [vmem:[%s1] sm:$0xf]
      %v181 = vld [vmem:[%s1 + $0x4] sm:$0xf]
      %v182 = vld [vmem:[%s1 + $0x8] sm:$0xf]
      %v183 = vld [vmem:[%s1 + $0xc] sm:$0xf]
      %v184 = vld [vmem:[%s1 + $0x10] sm:$0xf]
      %v185 = vld [vmem:[%s1 + $0x14] sm:$0xf]
      %v186 = vld [vmem:[%s1 + $0x18] sm:$0xf]
      %v187 = vld [vmem:[%s1 + $0x1c] sm:$0xf]
      %v188 = vld [vmem:[%s1 + $0x20] sm:$0xf]
      %v189 = vld [vmem:[%s1 + $0x24] sm:$0xf]
      %v190 = vld [vmem:[%s1 + $0x28] sm:$0xf]
      %v191 = vld [vmem:[%s1 + $0x2c] sm:$0xf]
      %v192 = vld [vmem:[%s1 + $0x30] sm:$0xf]
      %v193 = vld [vmem:[%s1 + $0x34] sm:$0xf]
      %v194 = vld [vmem:[%s1 + $0x38] sm:$0xf]
      %v195 = vld [vmem:[%s1 + $0x3c] sm:$0xf]
      %v196 = vlaneseq
      %v197 = vshrl.u32 %v196, 7
      %v198 = vsub.s32 0, %v197
      %v199 = vrot.slane %v177, %v198
      %v216 = vunpack.c.l.b16 %v180
      %v217 = vunpack.c.l.b16 %v181
      %v218 = vunpack.c.l.b16 %v182
      %v219 = vunpack.c.l.b16 %v183
      %v220 = vunpack.c.l.b16 %v184
      %v221 = vunpack.c.l.b16 %v185
      %v222 = vunpack.c.l.b16 %v186
      %v223 = vunpack.c.l.b16 %v187
      %v224 = vunpack.c.l.b16 %v188
      %v225 = vunpack.c.l.b16 %v189
      %v226 = vunpack.c.l.b16 %v190
      %v227 = vunpack.c.l.b16 %v191
      %v228 = vunpack.c.l.b16 %v192
      %v229 = vunpack.c.l.b16 %v193
      %v230 = vunpack.c.l.b16 %v194
      %v231 = vunpack.c.l.b16 %v195
      %v232 = vpack.c.b16 %v217, %v216
      %v233 = vpack.c.b16 %v219, %v218
      %v234 = vpack.c.b16 %v221, %v220
      %v235 = vpack.c.b16 %v223, %v222
      %v236 = vpack.c.b16 %v225, %v224
      %v237 = vpack.c.b16 %v227, %v226
      %v238 = vpack.c.b16 %v229, %v228
      %v239 = vpack.c.b16 %v231, %v230
      %248 = vmatprep.subr.bf16.mxu0 0
      %249 = vmatpush1.bf16.msra.mxu0 %v239
      %250 = vmatprep.subr.bf16.mxu0 0
      %251 = vmatpush1.bf16.msra.mxu0 %v238
      %252 = vmatprep.subr.bf16.mxu0 0
      %253 = vmatpush1.bf16.msra.mxu0 %v237
      %254 = vmatprep.subr.bf16.mxu0 0
      %255 = vmatpush1.bf16.msra.mxu0 %v236
      %256 = vmatprep.subr.bf16.mxu0 0
      %257 = vmatpush1.bf16.msra.mxu0 %v235
      %258 = vmatprep.subr.bf16.mxu0 0
      %259 = vmatpush1.bf16.msra.mxu0 %v234
      %260 = vmatprep.subr.bf16.mxu0 0
      %261 = vmatpush1.bf16.msra.mxu0 %v233
      %262 = vmatprep.subr.bf16.mxu0 0
      %263 = vmatpush1.bf16.msra.mxu0 %v232
      %264 = vmatprep.subr.bf16.mxu0 0
      %265 = vmatpush2.bf16.msra.mxu0 0
      %266 = vmatprep.subr.bf16.mxu0 0
      %267 = vmatpush2.bf16.msra.mxu0 0
      %268 = vmatprep.subr.bf16.mxu0 0
      %269 = vmatpush2.bf16.msra.mxu0 0
      %270 = vmatprep.subr.bf16.mxu0 0
      %271 = vmatpush2.bf16.msra.mxu0 0
      %272 = vmatprep.subr.bf16.mxu0 0
      %273 = vmatpush2.bf16.msra.mxu0 0
      %274 = vmatprep.subr.bf16.mxu0 0
      %275 = vmatpush2.bf16.msra.mxu0 0
      %276 = vmatprep.subr.bf16.mxu0 0
      %277 = vmatpush2.bf16.msra.mxu0 0
      %278 = vmatprep.subr.bf16.mxu0 0
      %279 = vmatpush2.bf16.msra.mxu0 0
      %280 = vmatprep.mubr.bf16.mxu0 0
      %281 = vmatmul.mubr.bf16.gmra.mxu0 %v179
      %v282 = vpop.f32.mrf.mxu0
      %v283 = vadd.f32 %v199, %v282
      %v284 = vpop.f32.mrf.mxu0
      %v285 = vpop.f32.mrf.mxu0
      %v286 = vadd.f32 %v199, %v285
      %v287 = vpop.f32.mrf.mxu0
      %288 = vdwg.mxu0
      %v289 = vmax.f32 %v283, 0.0
      %v290 = vmax.f32 %v286, 0.0
      %vm291 = vcmp.ne.f32.partialorder %v283, %v283
      %vm292 = vcmp.ne.f32.partialorder %v286, %v286
      %v293 = vadd.f32 %v283, 0.0
      %v294 = vadd.f32 %v286, 0.0
      %v295 = vand.u32 2147483647, %v283
      %v296 = vand.u32 2147483647, %v286
      %v297 = vsub.f32 0.0, %v295
      %v298 = vsub.f32 0.0, %v296
      %v299 = vmul.f32 %v297, 1.442695
      %v300 = vpow.pop %v299
      %v301 = vmul.f32 %v298, 1.442695
      %v302 = vpow.pop %v301
      %v303 = vadd.f32 %v300, 1.0
      %v304 = vlog2.pop %v303
      %v305 = vmul.f32 %v304, 0.6931472
      %v306 = vmul.f32 -0.5, %v300
      %v307 = vadd.f32 %v306, 1.0
      %v308 = vmul.f32 %v307, %v300
      %v309 = vand.u32 2147483647, %v300
      %vm310 = vcmp.lt.f32.partialorder %v309, 0.0004427343
      %v311 = vsel %vm310, %v308, %v305
      %v312 = vadd.f32 %v302, 1.0
      %v313 = vlog2.pop %v312
      %v314 = vmul.f32 %v313, 0.6931472
      %v315 = vmul.f32 -0.5, %v302
      %v316 = vadd.f32 %v315, 1.0
      %v317 = vmul.f32 %v316, %v302
      %v318 = vand.u32 2147483647, %v302
      %vm319 = vcmp.lt.f32.partialorder %v318, 0.0004427343
      %v320 = vsel %vm319, %v317, %v314
      %v321 = vadd.f32 %v289, %v311
      %v322 = vadd.f32 %v290, %v320
      %v323 = vsel %vm291, %v293, %v321
      %v324 = vsel %vm292, %v294, %v322
      %v325 = vtanh.pop %v323
      %v326 = vtanh.pop %v324
      %v327 = vmul.f32 %v283, %v325
      %v328 = vmul.f32 %v286, %v326
      %329 = vadd.xlane.f32.xlu0 %v327
      %v330 = vpop.xlane.xlu0 %329
      %331 = vadd.xlane.f32.xlu0 %v328
      %v332 = vpop.xlane.xlu0 %331
      %v333 = vmul.f32 %v330, 0.03125
      %v334 = vmul.f32 %v332, 0.03125
      %v335 = vmul.f32 %v327, %v327
      %v336 = vmul.f32 %v328, %v328
      %337 = vadd.xlane.f32.xlu0 %v335
      %v338 = vpop.xlane.xlu0 %337
      %339 = vadd.xlane.f32.xlu0 %v336
      %v340 = vpop.xlane.xlu0 %339
      %v341 = vmul.f32 %v338, 0.03125
      %v342 = vmul.f32 %v340, 0.03125
      %v343 = vmul.f32 %v333, %v333
      %v344 = vmul.f32 %v334, %v334
      %v345 = vsub.f32 %v341, %v343
      %v346 = vsub.f32 %v342, %v344
      %v347 = vsub.f32 %v327, %v333
      %v348 = vsub.f32 %v328, %v334
      %v349 = vadd.f32 %v345, 1e-05
      %v350 = vadd.f32 %v346, 1e-05
      %v351 = vrsqrt.pop %v349
      %v352 = vrsqrt.pop %v350
      %v353 = vmul.f32 %v347, %v351
      %v354 = vmul.f32 %v348, %v352
      %v355 = vlaneseq
      %v356 = vshrl.u32 %v355, 7
      %v357 = vsub.s32 6, %v356
      %v358 = vrot.slane %v177, %v357
      %v359 = vmul.f32 %v353, %v358
      %v360 = vmul.f32 %v354, %v358
      %v361 = vlaneseq
      %v362 = vshrl.u32 %v361, 7
      %v363 = vsub.s32 3, %v362
      %v364 = vrot.slane %v178, %v363
      %v365 = vadd.f32 %v359, %v364
      %v366 = vadd.f32 %v360, %v364
      %v367 = vpack.c.bf16 %v366, %v365
      %s368 = scalar_lea.vmem %s1, 64
      %v369 = vld [vmem:[%s368] sm:$0xf]
      %v370 = vld [vmem:[%s368 + $0x4] sm:$0xf]
      %v371 = vld [vmem:[%s368 + $0x8] sm:$0xf]
      %v372 = vld [vmem:[%s368 + $0xc] sm:$0xf]
      %v373 = vld [vmem:[%s368 + $0x10] sm:$0xf]
      %v374 = vld [vmem:[%s368 + $0x14] sm:$0xf]
      %v375 = vld [vmem:[%s368 + $0x18] sm:$0xf]
      %v376 = vld [vmem:[%s368 + $0x1c] sm:$0xf]
      %v377 = vld [vmem:[%s368 + $0x20] sm:$0xf]
      %v378 = vld [vmem:[%s368 + $0x24] sm:$0xf]
      %v379 = vld [vmem:[%s368 + $0x28] sm:$0xf]
      %v380 = vld [vmem:[%s368 + $0x2c] sm:$0xf]
      %v381 = vld [vmem:[%s368 + $0x30] sm:$0xf]
      %v382 = vld [vmem:[%s368 + $0x34] sm:$0xf]
      %v383 = vld [vmem:[%s368 + $0x38] sm:$0xf]
      %v384 = vld [vmem:[%s368 + $0x3c] sm:$0xf]
      %v385 = vlaneseq
      %v386 = vshrl.u32 %v385, 7
      %v387 = vsub.s32 1, %v386
      %v388 = vrot.slane %v177, %v387
      %v405 = vunpack.c.l.b16 %v369
      %v406 = vunpack.c.l.b16 %v370
      %v407 = vunpack.c.l.b16 %v371
      %v408 = vunpack.c.l.b16 %v372
      %v409 = vunpack.c.l.b16 %v373
      %v410 = vunpack.c.l.b16 %v374
      %v411 = vunpack.c.l.b16 %v375
      %v412 = vunpack.c.l.b16 %v376
      %v413 = vunpack.c.l.b16 %v377
      %v414 = vunpack.c.l.b16 %v378
      %v415 = vunpack.c.l.b16 %v379
      %v416 = vunpack.c.l.b16 %v380
      %v417 = vunpack.c.l.b16 %v381
      %v418 = vunpack.c.l.b16 %v382
      %v419 = vunpack.c.l.b16 %v383
      %v420 = vunpack.c.l.b16 %v384
      %v421 = vpack.c.b16 %v406, %v405
      %v422 = vpack.c.b16 %v408, %v407
      %v423 = vpack.c.b16 %v410, %v409
      %v424 = vpack.c.b16 %v412, %v411
      %v425 = vpack.c.b16 %v414, %v413
      %v426 = vpack.c.b16 %v416, %v415
      %v427 = vpack.c.b16 %v418, %v417
      %v428 = vpack.c.b16 %v420, %v419
      %437 = vmatprep.subr.bf16.mxu0 0
      %438 = vmatpush1.bf16.msra.mxu0 %v428
      %439 = vmatprep.subr.bf16.mxu0 0
      %440 = vmatpush1.bf16.msra.mxu0 %v427
      %441 = vmatprep.subr.bf16.mxu0 0
      %442 = vmatpush1.bf16.msra.mxu0 %v426
      %443 = vmatprep.subr.bf16.mxu0 0
      %444 = vmatpush1.bf16.msra.mxu0 %v425
      %445 = vmatprep.subr.bf16.mxu0 0
      %446 = vmatpush1.bf16.msra.mxu0 %v424
      %447 = vmatprep.subr.bf16.mxu0 0
      %448 = vmatpush1.bf16.msra.mxu0 %v423
      %449 = vmatprep.subr.bf16.mxu0 0
      %450 = vmatpush1.bf16.msra.mxu0 %v422
      %451 = vmatprep.subr.bf16.mxu0 0
      %452 = vmatpush1.bf16.msra.mxu0 %v421
      %453 = vmatprep.subr.bf16.mxu0 0
      %454 = vmatpush2.bf16.msra.mxu0 0
      %455 = vmatprep.subr.bf16.mxu0 0
      %456 = vmatpush2.bf16.msra.mxu0 0
      %457 = vmatprep.subr.bf16.mxu0 0
      %458 = vmatpush2.bf16.msra.mxu0 0
      %459 = vmatprep.subr.bf16.mxu0 0
      %460 = vmatpush2.bf16.msra.mxu0 0
      %461 = vmatprep.subr.bf16.mxu0 0
      %462 = vmatpush2.bf16.msra.mxu0 0
      %463 = vmatprep.subr.bf16.mxu0 0
      %464 = vmatpush2.bf16.msra.mxu0 0
      %465 = vmatprep.subr.bf16.mxu0 0
      %466 = vmatpush2.bf16.msra.mxu0 0
      %467 = vmatprep.subr.bf16.mxu0 0
      %468 = vmatpush2.bf16.msra.mxu0 0
      %469 = vmatprep.mubr.bf16.mxu0 0
      %470 = vmatmul.mubr.bf16.gmra.mxu0 %v367
      %v471 = vpop.f32.mrf.mxu0
      %v472 = vadd.f32 %v388, %v471
      %v473 = vpop.f32.mrf.mxu0
      %v474 = vpop.f32.mrf.mxu0
      %v475 = vadd.f32 %v388, %v474
      %v476 = vpop.f32.mrf.mxu0
      %477 = vdwg.mxu0
      %v478 = vmax.f32 %v472, 0.0
      %v479 = vmax.f32 %v475, 0.0
      %vm480 = vcmp.ne.f32.partialorder %v472, %v472
      %vm481 = vcmp.ne.f32.partialorder %v475, %v475
      %v482 = vadd.f32 %v472, 0.0
      %v483 = vadd.f32 %v475, 0.0
      %v484 = vand.u32 2147483647, %v472
      %v485 = vand.u32 2147483647, %v475
      %v486 = vsub.f32 0.0, %v484
      %v487 = vsub.f32 0.0, %v485
      %v488 = vmul.f32 %v486, 1.442695
      %v489 = vpow.pop %v488
      %v490 = vmul.f32 %v487, 1.442695
      %v491 = vpow.pop %v490
      %v492 = vadd.f32 %v489, 1.0
      %v493 = vlog2.pop %v492
      %v494 = vmul.f32 %v493, 0.6931472
      %v495 = vmul.f32 -0.5, %v489
      %v496 = vadd.f32 %v495, 1.0
      %v497 = vmul.f32 %v496, %v489
      %v498 = vand.u32 2147483647, %v489
      %vm499 = vcmp.lt.f32.partialorder %v498, 0.0004427343
      %v500 = vsel %vm499, %v497, %v494
      %v501 = vadd.f32 %v491, 1.0
      %v502 = vlog2.pop %v501
      %v503 = vmul.f32 %v502, 0.6931472
      %v504 = vmul.f32 -0.5, %v491
      %v505 = vadd.f32 %v504, 1.0
      %v506 = vmul.f32 %v505, %v491
      %v507 = vand.u32 2147483647, %v491
      %vm508 = vcmp.lt.f32.partialorder %v507, 0.0004427343
      %v509 = vsel %vm508, %v506, %v503
      %v510 = vadd.f32 %v478, %v500
      %v511 = vadd.f32 %v479, %v509
      %v512 = vsel %vm480, %v482, %v510
      %v513 = vsel %vm481, %v483, %v511
      %v514 = vtanh.pop %v512
      %v515 = vtanh.pop %v513
      %v516 = vmul.f32 %v472, %v514
      %v517 = vmul.f32 %v475, %v515
      %518 = vadd.xlane.f32.xlu0 %v516
      %v519 = vpop.xlane.xlu0 %518
      %520 = vadd.xlane.f32.xlu0 %v517
      %v521 = vpop.xlane.xlu0 %520
      %v522 = vmul.f32 %v519, 0.0625
      %v523 = vmul.f32 %v521, 0.0625
      %v524 = vmul.f32 %v516, %v516
      %v525 = vmul.f32 %v517, %v517
      %526 = vadd.xlane.f32.xlu0 %v524
      %v527 = vpop.xlane.xlu0 %526
      %528 = vadd.xlane.f32.xlu0 %v525
      %v529 = vpop.xlane.xlu0 %528
      %v530 = vmul.f32 %v527, 0.0625
      %v531 = vmul.f32 %v529, 0.0625
      %v532 = vmul.f32 %v522, %v522
      %v533 = vmul.f32 %v523, %v523
      %v534 = vsub.f32 %v530, %v532
      %v535 = vsub.f32 %v531, %v533
      %v536 = vsub.f32 %v516, %v522
      %v537 = vsub.f32 %v517, %v523
      %v538 = vadd.f32 %v534, 1e-05
      %v539 = vadd.f32 %v535, 1e-05
      %v540 = vrsqrt.pop %v538
      %v541 = vrsqrt.pop %v539
      %v542 = vmul.f32 %v536, %v540
      %v543 = vmul.f32 %v537, %v541
      %v544 = vlaneseq
      %v545 = vshrl.u32 %v544, 7
      %v546 = vsub.s32 7, %v545
      %v547 = vrot.slane %v177, %v546
      %v548 = vmul.f32 %v542, %v547
      %v549 = vmul.f32 %v543, %v547
      %v550 = vlaneseq
      %v551 = vshrl.u32 %v550, 7
      %v552 = vsub.s32 4, %v551
      %v553 = vrot.slane %v178, %v552
      %v554 = vadd.f32 %v548, %v553
      %v555 = vadd.f32 %v549, %v553
      %v556 = vpack.c.bf16 %v555, %v554
      %s557 = scalar_lea.vmem %s1, 128
      %v558 = vld [vmem:[%s557] sm:$0xf]
      %v559 = vld [vmem:[%s557 + $0x4] sm:$0xf]
      %v560 = vld [vmem:[%s557 + $0x8] sm:$0xf]
      %v561 = vld [vmem:[%s557 + $0xc] sm:$0xf]
      %v562 = vld [vmem:[%s557 + $0x10] sm:$0xf]
      %v563 = vld [vmem:[%s557 + $0x14] sm:$0xf]
      %v564 = vld [vmem:[%s557 + $0x18] sm:$0xf]
      %v565 = vld [vmem:[%s557 + $0x1c] sm:$0xf]
      %v566 = vld [vmem:[%s557 + $0x20] sm:$0xf]
      %v567 = vld [vmem:[%s557 + $0x24] sm:$0xf]
      %v568 = vld [vmem:[%s557 + $0x28] sm:$0xf]
      %v569 = vld [vmem:[%s557 + $0x2c] sm:$0xf]
      %v570 = vld [vmem:[%s557 + $0x30] sm:$0xf]
      %v571 = vld [vmem:[%s557 + $0x34] sm:$0xf]
      %v572 = vld [vmem:[%s557 + $0x38] sm:$0xf]
      %v573 = vld [vmem:[%s557 + $0x3c] sm:$0xf]
      %v574 = vlaneseq
      %v575 = vshrl.u32 %v574, 7
      %v576 = vsub.s32 2, %v575
      %v577 = vrot.slane %v177, %v576
      %v594 = vunpack.c.l.b16 %v558
      %v595 = vunpack.c.l.b16 %v559
      %v596 = vunpack.c.l.b16 %v560
      %v597 = vunpack.c.l.b16 %v561
      %v598 = vunpack.c.l.b16 %v562
      %v599 = vunpack.c.l.b16 %v563
      %v600 = vunpack.c.l.b16 %v564
      %v601 = vunpack.c.l.b16 %v565
      %v602 = vunpack.c.l.b16 %v566
      %v603 = vunpack.c.l.b16 %v567
      %v604 = vunpack.c.l.b16 %v568
      %v605 = vunpack.c.l.b16 %v569
      %v606 = vunpack.c.l.b16 %v570
      %v607 = vunpack.c.l.b16 %v571
      %v608 = vunpack.c.l.b16 %v572
      %v609 = vunpack.c.l.b16 %v573
      %v610 = vpack.c.b16 %v595, %v594
      %v611 = vpack.c.b16 %v597, %v596
      %v612 = vpack.c.b16 %v599, %v598
      %v613 = vpack.c.b16 %v601, %v600
      %v614 = vpack.c.b16 %v603, %v602
      %v615 = vpack.c.b16 %v605, %v604
      %v616 = vpack.c.b16 %v607, %v606
      %v617 = vpack.c.b16 %v609, %v608
      %626 = vmatprep.subr.bf16.mxu0 0
      %627 = vmatpush1.bf16.msra.mxu0 %v617
      %628 = vmatprep.subr.bf16.mxu0 0
      %629 = vmatpush1.bf16.msra.mxu0 %v616
      %630 = vmatprep.subr.bf16.mxu0 0
      %631 = vmatpush1.bf16.msra.mxu0 %v615
      %632 = vmatprep.subr.bf16.mxu0 0
      %633 = vmatpush1.bf16.msra.mxu0 %v614
      %634 = vmatprep.subr.bf16.mxu0 0
      %635 = vmatpush1.bf16.msra.mxu0 %v613
      %636 = vmatprep.subr.bf16.mxu0 0
      %637 = vmatpush1.bf16.msra.mxu0 %v612
      %638 = vmatprep.subr.bf16.mxu0 0
      %639 = vmatpush1.bf16.msra.mxu0 %v611
      %640 = vmatprep.subr.bf16.mxu0 0
      %641 = vmatpush1.bf16.msra.mxu0 %v610
      %642 = vmatprep.subr.bf16.mxu0 0
      %643 = vmatpush2.bf16.msra.mxu0 0
      %644 = vmatprep.subr.bf16.mxu0 0
      %645 = vmatpush2.bf16.msra.mxu0 0
      %646 = vmatprep.subr.bf16.mxu0 0
      %647 = vmatpush2.bf16.msra.mxu0 0
      %648 = vmatprep.subr.bf16.mxu0 0
      %649 = vmatpush2.bf16.msra.mxu0 0
      %650 = vmatprep.subr.bf16.mxu0 0
      %651 = vmatpush2.bf16.msra.mxu0 0
      %652 = vmatprep.subr.bf16.mxu0 0
      %653 = vmatpush2.bf16.msra.mxu0 0
      %654 = vmatprep.subr.bf16.mxu0 0
      %655 = vmatpush2.bf16.msra.mxu0 0
      %656 = vmatprep.subr.bf16.mxu0 0
      %657 = vmatpush2.bf16.msra.mxu0 0
      %658 = vmatprep.mubr.bf16.mxu0 0
      %659 = vmatmul.mubr.bf16.gmra.mxu0 %v556
      %v660 = vpop.f32.mrf.mxu0
      %v661 = vadd.f32 %v577, %v660
      %v662 = vpop.f32.mrf.mxu0
      %v663 = vpop.f32.mrf.mxu0
      %v664 = vadd.f32 %v577, %v663
      %v665 = vpop.f32.mrf.mxu0
      %666 = vdwg.mxu0
      %667 = vadd.xlane.f32.xlu0 %v661
      %v668 = vpop.xlane.xlu0 %667
      %669 = vadd.xlane.f32.xlu0 %v664
      %v670 = vpop.xlane.xlu0 %669
      %v671 = vmul.f32 %v668, 0.125
      %v672 = vmul.f32 %v670, 0.125
      %v673 = vmul.f32 %v661, %v661
      %v674 = vmul.f32 %v664, %v664
      %675 = vadd.xlane.f32.xlu0 %v673
      %v676 = vpop.xlane.xlu0 %675
      %677 = vadd.xlane.f32.xlu0 %v674
      %v678 = vpop.xlane.xlu0 %677
      %v679 = vmul.f32 %v676, 0.125
      %v680 = vmul.f32 %v678, 0.125
      %v681 = vmul.f32 %v671, %v671
      %v682 = vmul.f32 %v672, %v672
      %v683 = vsub.f32 %v679, %v681
      %v684 = vsub.f32 %v680, %v682
      %v685 = vsub.f32 %v661, %v671
      %v686 = vsub.f32 %v664, %v672
      %v687 = vadd.f32 %v683, 1e-05
      %v688 = vadd.f32 %v684, 1e-05
      %v689 = vrsqrt.pop %v687
      %v690 = vrsqrt.pop %v688
      %v691 = vmul.f32 %v685, %v689
      %v692 = vmul.f32 %v686, %v690
      %v693 = vlaneseq
      %v694 = vshrl.u32 %v693, 7
      %v695 = vsub.s32 0, %v694
      %v696 = vrot.slane %v178, %v695
      %v697 = vmul.f32 %v691, %v696
      %v698 = vmul.f32 %v692, %v696
      %v699 = vlaneseq
      %v700 = vshrl.u32 %v699, 7
      %v701 = vsub.s32 5, %v700
      %v702 = vrot.slane %v178, %v701
      %v703 = vadd.f32 %v697, %v702
      %v704 = vadd.f32 %v698, %v702
      %v705 = vpack.c.bf16 %v704, %v703
      %s706 = scalar_lea.vmem %s1, 192
      %v707 = vld [vmem:[%s706] sm:$0xf]
      %v708 = vld [vmem:[%s706 + $0x4] sm:$0xf]
      %v709 = vld [vmem:[%s706 + $0x8] sm:$0xf]
      %v710 = vld [vmem:[%s706 + $0xc] sm:$0xf]
      %v711 = vld [vmem:[%s706 + $0x10] sm:$0xf]
      %v712 = vld [vmem:[%s706 + $0x14] sm:$0xf]
      %v713 = vld [vmem:[%s706 + $0x18] sm:$0xf]
      %v714 = vld [vmem:[%s706 + $0x1c] sm:$0xf]
      %v715 = vld [vmem:[%s706 + $0x20] sm:$0xf]
      %v716 = vld [vmem:[%s706 + $0x24] sm:$0xf]
      %v717 = vld [vmem:[%s706 + $0x28] sm:$0xf]
      %v718 = vld [vmem:[%s706 + $0x2c] sm:$0xf]
      %v719 = vld [vmem:[%s706 + $0x30] sm:$0xf]
      %v720 = vld [vmem:[%s706 + $0x34] sm:$0xf]
      %v721 = vld [vmem:[%s706 + $0x38] sm:$0xf]
      %v722 = vld [vmem:[%s706 + $0x3c] sm:$0xf]
      %v723 = vlaneseq
      %v724 = vshrl.u32 %v723, 7
      %v725 = vsub.s32 3, %v724
      %v726 = vrot.slane %v177, %v725
      %v743 = vunpack.c.l.b16 %v707
      %v744 = vunpack.c.l.b16 %v708
      %v745 = vunpack.c.l.b16 %v709
      %v746 = vunpack.c.l.b16 %v710
      %v747 = vunpack.c.l.b16 %v711
      %v748 = vunpack.c.l.b16 %v712
      %v749 = vunpack.c.l.b16 %v713
      %v750 = vunpack.c.l.b16 %v714
      %v751 = vunpack.c.l.b16 %v715
      %v752 = vunpack.c.l.b16 %v716
      %v753 = vunpack.c.l.b16 %v717
      %v754 = vunpack.c.l.b16 %v718
      %v755 = vunpack.c.l.b16 %v719
      %v756 = vunpack.c.l.b16 %v720
      %v757 = vunpack.c.l.b16 %v721
      %v758 = vunpack.c.l.b16 %v722
      %v759 = vpack.c.b16 %v744, %v743
      %v760 = vpack.c.b16 %v746, %v745
      %v761 = vpack.c.b16 %v748, %v747
      %v762 = vpack.c.b16 %v750, %v749
      %v763 = vpack.c.b16 %v752, %v751
      %v764 = vpack.c.b16 %v754, %v753
      %v765 = vpack.c.b16 %v756, %v755
      %v766 = vpack.c.b16 %v758, %v757
      %775 = vmatprep.subr.bf16.mxu0 0
      %776 = vmatpush1.bf16.msra.mxu0 %v766
      %777 = vmatprep.subr.bf16.mxu0 0
      %778 = vmatpush1.bf16.msra.mxu0 %v765
      %779 = vmatprep.subr.bf16.mxu0 0
      %780 = vmatpush1.bf16.msra.mxu0 %v764
      %781 = vmatprep.subr.bf16.mxu0 0
      %782 = vmatpush1.bf16.msra.mxu0 %v763
      %783 = vmatprep.subr.bf16.mxu0 0
      %784 = vmatpush1.bf16.msra.mxu0 %v762
      %785 = vmatprep.subr.bf16.mxu0 0
      %786 = vmatpush1.bf16.msra.mxu0 %v761
      %787 = vmatprep.subr.bf16.mxu0 0
      %788 = vmatpush1.bf16.msra.mxu0 %v760
      %789 = vmatprep.subr.bf16.mxu0 0
      %790 = vmatpush1.bf16.msra.mxu0 %v759
      %791 = vmatprep.subr.bf16.mxu0 0
      %792 = vmatpush2.bf16.msra.mxu0 0
      %793 = vmatprep.subr.bf16.mxu0 0
      %794 = vmatpush2.bf16.msra.mxu0 0
      %795 = vmatprep.subr.bf16.mxu0 0
      %796 = vmatpush2.bf16.msra.mxu0 0
      %797 = vmatprep.subr.bf16.mxu0 0
      %798 = vmatpush2.bf16.msra.mxu0 0
      %799 = vmatprep.subr.bf16.mxu0 0
      %800 = vmatpush2.bf16.msra.mxu0 0
      %801 = vmatprep.subr.bf16.mxu0 0
      %802 = vmatpush2.bf16.msra.mxu0 0
      %803 = vmatprep.subr.bf16.mxu0 0
      %804 = vmatpush2.bf16.msra.mxu0 0
      %805 = vmatprep.subr.bf16.mxu0 0
      %806 = vmatpush2.bf16.msra.mxu0 0
      %807 = vmatprep.mubr.bf16.mxu0 0
      %808 = vmatmul.mubr.bf16.gmra.mxu0 %v705
      %v809 = vpop.f32.mrf.mxu0
      %v810 = vadd.f32 %v726, %v809
      %v811 = vpop.f32.mrf.mxu0
      %v812 = vpop.f32.mrf.mxu0
      %v813 = vadd.f32 %v726, %v812
      %v814 = vpop.f32.mrf.mxu0
      %815 = vdwg.mxu0
      %v816 = vmax.f32 %v810, 0.0
      %v817 = vmax.f32 %v813, 0.0
      %vm818 = vcmp.ne.f32.partialorder %v810, %v810
      %vm819 = vcmp.ne.f32.partialorder %v813, %v813
      %v820 = vadd.f32 %v810, 0.0
      %v821 = vadd.f32 %v813, 0.0
      %v822 = vand.u32 2147483647, %v810
      %v823 = vand.u32 2147483647, %v813
      %v824 = vsub.f32 0.0, %v822
      %v825 = vsub.f32 0.0, %v823
      %v826 = vmul.f32 %v824, 1.442695
      %v827 = vpow.pop %v826
      %v828 = vmul.f32 %v825, 1.442695
      %v829 = vpow.pop %v828
      %v830 = vadd.f32 %v827, 1.0
      %v831 = vlog2.pop %v830
      %v832 = vmul.f32 %v831, 0.6931472
      %v833 = vmul.f32 -0.5, %v827
      %v834 = vadd.f32 %v833, 1.0
      %v835 = vmul.f32 %v834, %v827
      %v836 = vand.u32 2147483647, %v827
      %vm837 = vcmp.lt.f32.partialorder %v836, 0.0004427343
      %v838 = vsel %vm837, %v835, %v832
      %v839 = vadd.f32 %v829, 1.0
      %v840 = vlog2.pop %v839
      %v841 = vmul.f32 %v840, 0.6931472
      %v842 = vmul.f32 -0.5, %v829
      %v843 = vadd.f32 %v842, 1.0
      %v844 = vmul.f32 %v843, %v829
      %v845 = vand.u32 2147483647, %v829
      %vm846 = vcmp.lt.f32.partialorder %v845, 0.0004427343
      %v847 = vsel %vm846, %v844, %v841
      %v848 = vadd.f32 %v816, %v838
      %v849 = vadd.f32 %v817, %v847
      %v850 = vsel %vm818, %v820, %v848
      %v851 = vsel %vm819, %v821, %v849
      %v852 = vtanh.pop %v850
      %v853 = vtanh.pop %v851
      %v854 = vmul.f32 %v810, %v852
      %v855 = vmul.f32 %v813, %v853
      %856 = vadd.xlane.f32.xlu0 %v854
      %v857 = vpop.xlane.xlu0 %856
      %858 = vadd.xlane.f32.xlu0 %v855
      %v859 = vpop.xlane.xlu0 %858
      %v860 = vmul.f32 %v857, 0.0625
      %v861 = vmul.f32 %v859, 0.0625
      %v862 = vmul.f32 %v854, %v854
      %v863 = vmul.f32 %v855, %v855
      %864 = vadd.xlane.f32.xlu0 %v862
      %v865 = vpop.xlane.xlu0 %864
      %866 = vadd.xlane.f32.xlu0 %v863
      %v867 = vpop.xlane.xlu0 %866
      %v868 = vmul.f32 %v865, 0.0625
      %v869 = vmul.f32 %v867, 0.0625
      %v870 = vmul.f32 %v860, %v860
      %v871 = vmul.f32 %v861, %v861
      %v872 = vsub.f32 %v868, %v870
      %v873 = vsub.f32 %v869, %v871
      %v874 = vsub.f32 %v854, %v860
      %v875 = vsub.f32 %v855, %v861
      %v876 = vadd.f32 %v872, 1e-05
      %v877 = vadd.f32 %v873, 1e-05
      %v878 = vrsqrt.pop %v876
      %v879 = vrsqrt.pop %v877
      %v880 = vmul.f32 %v874, %v878
      %v881 = vmul.f32 %v875, %v879
      %v882 = vlaneseq
      %v883 = vshrl.u32 %v882, 7
      %v884 = vsub.s32 1, %v883
      %v885 = vrot.slane %v178, %v884
      %v886 = vmul.f32 %v880, %v885
      %v887 = vmul.f32 %v881, %v885
      %v888 = vlaneseq
      %v889 = vshrl.u32 %v888, 7
      %v890 = vsub.s32 6, %v889
      %v891 = vrot.slane %v178, %v890
      %v892 = vadd.f32 %v886, %v891
      %v893 = vadd.f32 %v887, %v891
      %v894 = vpack.c.bf16 %v893, %v892
      %s895 = scalar_lea.vmem %s1, 256
      %v896 = vld [vmem:[%s895] sm:$0xf]
      %v897 = vld [vmem:[%s895 + $0x4] sm:$0xf]
      %v898 = vld [vmem:[%s895 + $0x8] sm:$0xf]
      %v899 = vld [vmem:[%s895 + $0xc] sm:$0xf]
      %v900 = vld [vmem:[%s895 + $0x10] sm:$0xf]
      %v901 = vld [vmem:[%s895 + $0x14] sm:$0xf]
      %v902 = vld [vmem:[%s895 + $0x18] sm:$0xf]
      %v903 = vld [vmem:[%s895 + $0x1c] sm:$0xf]
      %v904 = vld [vmem:[%s895 + $0x20] sm:$0xf]
      %v905 = vld [vmem:[%s895 + $0x24] sm:$0xf]
      %v906 = vld [vmem:[%s895 + $0x28] sm:$0xf]
      %v907 = vld [vmem:[%s895 + $0x2c] sm:$0xf]
      %v908 = vld [vmem:[%s895 + $0x30] sm:$0xf]
      %v909 = vld [vmem:[%s895 + $0x34] sm:$0xf]
      %v910 = vld [vmem:[%s895 + $0x38] sm:$0xf]
      %v911 = vld [vmem:[%s895 + $0x3c] sm:$0xf]
      %v912 = vlaneseq
      %v913 = vshrl.u32 %v912, 7
      %v914 = vsub.s32 4, %v913
      %v915 = vrot.slane %v177, %v914
      %v932 = vunpack.c.l.b16 %v896
      %v933 = vunpack.c.l.b16 %v897
      %v934 = vunpack.c.l.b16 %v898
      %v935 = vunpack.c.l.b16 %v899
      %v936 = vunpack.c.l.b16 %v900
      %v937 = vunpack.c.l.b16 %v901
      %v938 = vunpack.c.l.b16 %v902
      %v939 = vunpack.c.l.b16 %v903
      %v940 = vunpack.c.l.b16 %v904
      %v941 = vunpack.c.l.b16 %v905
      %v942 = vunpack.c.l.b16 %v906
      %v943 = vunpack.c.l.b16 %v907
      %v944 = vunpack.c.l.b16 %v908
      %v945 = vunpack.c.l.b16 %v909
      %v946 = vunpack.c.l.b16 %v910
      %v947 = vunpack.c.l.b16 %v911
      %v948 = vpack.c.b16 %v933, %v932
      %v949 = vpack.c.b16 %v935, %v934
      %v950 = vpack.c.b16 %v937, %v936
      %v951 = vpack.c.b16 %v939, %v938
      %v952 = vpack.c.b16 %v941, %v940
      %v953 = vpack.c.b16 %v943, %v942
      %v954 = vpack.c.b16 %v945, %v944
      %v955 = vpack.c.b16 %v947, %v946
      %964 = vmatprep.subr.bf16.mxu0 0
      %965 = vmatpush1.bf16.msra.mxu0 %v955
      %966 = vmatprep.subr.bf16.mxu0 0
      %967 = vmatpush1.bf16.msra.mxu0 %v954
      %968 = vmatprep.subr.bf16.mxu0 0
      %969 = vmatpush1.bf16.msra.mxu0 %v953
      %970 = vmatprep.subr.bf16.mxu0 0
      %971 = vmatpush1.bf16.msra.mxu0 %v952
      %972 = vmatprep.subr.bf16.mxu0 0
      %973 = vmatpush1.bf16.msra.mxu0 %v951
      %974 = vmatprep.subr.bf16.mxu0 0
      %975 = vmatpush1.bf16.msra.mxu0 %v950
      %976 = vmatprep.subr.bf16.mxu0 0
      %977 = vmatpush1.bf16.msra.mxu0 %v949
      %978 = vmatprep.subr.bf16.mxu0 0
      %979 = vmatpush1.bf16.msra.mxu0 %v948
      %980 = vmatprep.subr.bf16.mxu0 0
      %981 = vmatpush2.bf16.msra.mxu0 0
      %982 = vmatprep.subr.bf16.mxu0 0
      %983 = vmatpush2.bf16.msra.mxu0 0
      %984 = vmatprep.subr.bf16.mxu0 0
      %985 = vmatpush2.bf16.msra.mxu0 0
      %986 = vmatprep.subr.bf16.mxu0 0
      %987 = vmatpush2.bf16.msra.mxu0 0
      %988 = vmatprep.subr.bf16.mxu0 0
      %989 = vmatpush2.bf16.msra.mxu0 0
      %990 = vmatprep.subr.bf16.mxu0 0
      %991 = vmatpush2.bf16.msra.mxu0 0
      %992 = vmatprep.subr.bf16.mxu0 0
      %993 = vmatpush2.bf16.msra.mxu0 0
      %994 = vmatprep.subr.bf16.mxu0 0
      %995 = vmatpush2.bf16.msra.mxu0 0
      %996 = vmatprep.mubr.bf16.mxu0 0
      %997 = vmatmul.mubr.bf16.gmra.mxu0 %v894
      %v998 = vpop.f32.mrf.mxu0
      %v999 = vadd.f32 %v915, %v998
      %v1000 = vpop.f32.mrf.mxu0
      %v1001 = vpop.f32.mrf.mxu0
      %v1002 = vadd.f32 %v915, %v1001
      %v1003 = vpop.f32.mrf.mxu0
      %1004 = vdwg.mxu0
      %v1005 = vmax.f32 %v999, 0.0
      %v1006 = vmax.f32 %v1002, 0.0
      %vm1007 = vcmp.ne.f32.partialorder %v999, %v999
      %vm1008 = vcmp.ne.f32.partialorder %v1002, %v1002
      %v1009 = vadd.f32 %v999, 0.0
      %v1010 = vadd.f32 %v1002, 0.0
      %v1011 = vand.u32 2147483647, %v999
      %v1012 = vand.u32 2147483647, %v1002
      %v1013 = vsub.f32 0.0, %v1011
      %v1014 = vsub.f32 0.0, %v1012
      %v1015 = vmul.f32 %v1013, 1.442695
      %v1016 = vpow.pop %v1015
      %v1017 = vmul.f32 %v1014, 1.442695
      %v1018 = vpow.pop %v1017
      %v1019 = vadd.f32 %v1016, 1.0
      %v1020 = vlog2.pop %v1019
      %v1021 = vmul.f32 %v1020, 0.6931472
      %v1022 = vmul.f32 -0.5, %v1016
      %v1023 = vadd.f32 %v1022, 1.0
      %v1024 = vmul.f32 %v1023, %v1016
      %v1025 = vand.u32 2147483647, %v1016
      %vm1026 = vcmp.lt.f32.partialorder %v1025, 0.0004427343
      %v1027 = vsel %vm1026, %v1024, %v1021
      %v1028 = vadd.f32 %v1018, 1.0
      %v1029 = vlog2.pop %v1028
      %v1030 = vmul.f32 %v1029, 0.6931472
      %v1031 = vmul.f32 -0.5, %v1018
      %v1032 = vadd.f32 %v1031, 1.0
      %v1033 = vmul.f32 %v1032, %v1018
      %v1034 = vand.u32 2147483647, %v1018
      %vm1035 = vcmp.lt.f32.partialorder %v1034, 0.0004427343
      %v1036 = vsel %vm1035, %v1033, %v1030
      %v1037 = vadd.f32 %v1005, %v1027
      %v1038 = vadd.f32 %v1006, %v1036
      %v1039 = vsel %vm1007, %v1009, %v1037
      %v1040 = vsel %vm1008, %v1010, %v1038
      %v1041 = vtanh.pop %v1039
      %v1042 = vtanh.pop %v1040
      %v1043 = vmul.f32 %v999, %v1041
      %v1044 = vmul.f32 %v1002, %v1042
      %1045 = vadd.xlane.f32.xlu0 %v1043
      %v1046 = vpop.xlane.xlu0 %1045
      %1047 = vadd.xlane.f32.xlu0 %v1044
      %v1048 = vpop.xlane.xlu0 %1047
      %v1049 = vmul.f32 %v1046, 0.03125
      %v1050 = vmul.f32 %v1048, 0.03125
      %v1051 = vmul.f32 %v1043, %v1043
      %v1052 = vmul.f32 %v1044, %v1044
      %1053 = vadd.xlane.f32.xlu0 %v1051
      %v1054 = vpop.xlane.xlu0 %1053
      %1055 = vadd.xlane.f32.xlu0 %v1052
      %v1056 = vpop.xlane.xlu0 %1055
      %v1057 = vmul.f32 %v1054, 0.03125
      %v1058 = vmul.f32 %v1056, 0.03125
      %v1059 = vmul.f32 %v1049, %v1049
      %v1060 = vmul.f32 %v1050, %v1050
      %v1061 = vsub.f32 %v1057, %v1059
      %v1062 = vsub.f32 %v1058, %v1060
      %v1063 = vsub.f32 %v1043, %v1049
      %v1064 = vsub.f32 %v1044, %v1050
      %v1065 = vadd.f32 %v1061, 1e-05
      %v1066 = vadd.f32 %v1062, 1e-05
      %v1067 = vrsqrt.pop %v1065
      %v1068 = vrsqrt.pop %v1066
      %v1069 = vmul.f32 %v1063, %v1067
      %v1070 = vmul.f32 %v1064, %v1068
      %v1071 = vlaneseq
      %v1072 = vshrl.u32 %v1071, 7
      %v1073 = vsub.s32 2, %v1072
      %v1074 = vrot.slane %v178, %v1073
      %v1075 = vmul.f32 %v1069, %v1074
      %v1076 = vmul.f32 %v1070, %v1074
      %v1077 = vlaneseq
      %v1078 = vshrl.u32 %v1077, 7
      %v1079 = vsub.s32 7, %v1078
      %v1080 = vrot.slane %v178, %v1079
      %v1081 = vadd.f32 %v1075, %v1080
      %v1082 = vadd.f32 %v1076, %v1080
      %v1083 = vpack.c.bf16 %v1082, %v1081
      %s1084 = scalar_lea.vmem %s1, 320
      %v1085 = vld [vmem:[%s1084] sm:$0xf]
      %v1086 = vld [vmem:[%s1084 + $0x4] sm:$0xf]
      %v1087 = vld [vmem:[%s1084 + $0x8] sm:$0xf]
      %v1088 = vld [vmem:[%s1084 + $0xc] sm:$0xf]
      %v1089 = vld [vmem:[%s1084 + $0x10] sm:$0xf]
      %v1090 = vld [vmem:[%s1084 + $0x14] sm:$0xf]
      %v1091 = vld [vmem:[%s1084 + $0x18] sm:$0xf]
      %v1092 = vld [vmem:[%s1084 + $0x1c] sm:$0xf]
      %v1093 = vld [vmem:[%s1084 + $0x20] sm:$0xf]
      %v1094 = vld [vmem:[%s1084 + $0x24] sm:$0xf]
      %v1095 = vld [vmem:[%s1084 + $0x28] sm:$0xf]
      %v1096 = vld [vmem:[%s1084 + $0x2c] sm:$0xf]
      %v1097 = vld [vmem:[%s1084 + $0x30] sm:$0xf]
      %v1098 = vld [vmem:[%s1084 + $0x34] sm:$0xf]
      %v1099 = vld [vmem:[%s1084 + $0x38] sm:$0xf]
      %v1100 = vld [vmem:[%s1084 + $0x3c] sm:$0xf]
      %v1101 = vlaneseq
      %v1102 = vshrl.u32 %v1101, 7
      %v1103 = vsub.s32 5, %v1102
      %v1104 = vrot.slane %v177, %v1103
      %v1121 = vunpack.c.l.b16 %v1085
      %v1122 = vunpack.c.l.b16 %v1086
      %v1123 = vunpack.c.l.b16 %v1087
      %v1124 = vunpack.c.l.b16 %v1088
      %v1125 = vunpack.c.l.b16 %v1089
      %v1126 = vunpack.c.l.b16 %v1090
      %v1127 = vunpack.c.l.b16 %v1091
      %v1128 = vunpack.c.l.b16 %v1092
      %v1129 = vunpack.c.l.b16 %v1093
      %v1130 = vunpack.c.l.b16 %v1094
      %v1131 = vunpack.c.l.b16 %v1095
      %v1132 = vunpack.c.l.b16 %v1096
      %v1133 = vunpack.c.l.b16 %v1097
      %v1134 = vunpack.c.l.b16 %v1098
      %v1135 = vunpack.c.l.b16 %v1099
      %v1136 = vunpack.c.l.b16 %v1100
      %v1137 = vpack.c.b16 %v1122, %v1121
      %v1138 = vpack.c.b16 %v1124, %v1123
      %v1139 = vpack.c.b16 %v1126, %v1125
      %v1140 = vpack.c.b16 %v1128, %v1127
      %v1141 = vpack.c.b16 %v1130, %v1129
      %v1142 = vpack.c.b16 %v1132, %v1131
      %v1143 = vpack.c.b16 %v1134, %v1133
      %v1144 = vpack.c.b16 %v1136, %v1135
      %1153 = vmatprep.subr.bf16.mxu0 0
      %1154 = vmatpush1.bf16.msra.mxu0 %v1144
      %1155 = vmatprep.subr.bf16.mxu0 0
      %1156 = vmatpush1.bf16.msra.mxu0 %v1143
      %1157 = vmatprep.subr.bf16.mxu0 0
      %1158 = vmatpush1.bf16.msra.mxu0 %v1142
      %1159 = vmatprep.subr.bf16.mxu0 0
      %1160 = vmatpush1.bf16.msra.mxu0 %v1141
      %1161 = vmatprep.subr.bf16.mxu0 0
      %1162 = vmatpush1.bf16.msra.mxu0 %v1140
      %1163 = vmatprep.subr.bf16.mxu0 0
      %1164 = vmatpush1.bf16.msra.mxu0 %v1139
      %1165 = vmatprep.subr.bf16.mxu0 0
      %1166 = vmatpush1.bf16.msra.mxu0 %v1138
      %1167 = vmatprep.subr.bf16.mxu0 0
      %1168 = vmatpush1.bf16.msra.mxu0 %v1137
      %1169 = vmatprep.subr.bf16.mxu0 0
      %1170 = vmatpush2.bf16.msra.mxu0 0
      %1171 = vmatprep.subr.bf16.mxu0 0
      %1172 = vmatpush2.bf16.msra.mxu0 0
      %1173 = vmatprep.subr.bf16.mxu0 0
      %1174 = vmatpush2.bf16.msra.mxu0 0
      %1175 = vmatprep.subr.bf16.mxu0 0
      %1176 = vmatpush2.bf16.msra.mxu0 0
      %1177 = vmatprep.subr.bf16.mxu0 0
      %1178 = vmatpush2.bf16.msra.mxu0 0
      %1179 = vmatprep.subr.bf16.mxu0 0
      %1180 = vmatpush2.bf16.msra.mxu0 0
      %1181 = vmatprep.subr.bf16.mxu0 0
      %1182 = vmatpush2.bf16.msra.mxu0 0
      %1183 = vmatprep.subr.bf16.mxu0 0
      %1184 = vmatpush2.bf16.msra.mxu0 0
      %1185 = vmatprep.mubr.bf16.mxu0 0
      %1186 = vmatmul.mubr.bf16.gmra.mxu0 %v1083
      %v1187 = vpop.f32.mrf.mxu0
      %v1188 = vadd.f32 %v1104, %v1187
      %v1189 = vpop.f32.mrf.mxu0
      %v1190 = vpop.f32.mrf.mxu0
      %v1191 = vadd.f32 %v1104, %v1190
      %v1192 = vpop.f32.mrf.mxu0
      %1193 = vdwg.mxu0
      %v1194 = vpack.c.bf16 %v1191, %v1188
      %s1195 = scalar_lea.vmem %s1, 384
      %v1196 = vld [vmem:[%s1195] sm:$0xf]
      %v1197 = vld [vmem:[%s1195 + $0x4] sm:$0xf]
      %v1198 = vld [vmem:[%s1195 + $0x8] sm:$0xf]
      %v1199 = vld [vmem:[%s1195 + $0xc] sm:$0xf]
      %v1200 = vld [vmem:[%s1195 + $0x10] sm:$0xf]
      %v1201 = vld [vmem:[%s1195 + $0x14] sm:$0xf]
      %v1202 = vld [vmem:[%s1195 + $0x18] sm:$0xf]
      %v1203 = vld [vmem:[%s1195 + $0x1c] sm:$0xf]
      %v1204 = vld [vmem:[%s1195 + $0x20] sm:$0xf]
      %v1205 = vld [vmem:[%s1195 + $0x24] sm:$0xf]
      %v1206 = vld [vmem:[%s1195 + $0x28] sm:$0xf]
      %v1207 = vld [vmem:[%s1195 + $0x2c] sm:$0xf]
      %v1208 = vld [vmem:[%s1195 + $0x30] sm:$0xf]
      %v1209 = vld [vmem:[%s1195 + $0x34] sm:$0xf]
      %v1210 = vld [vmem:[%s1195 + $0x38] sm:$0xf]
      %v1211 = vld [vmem:[%s1195 + $0x3c] sm:$0xf]
      %v1228 = vunpack.c.l.b16 %v1196
      %v1229 = vunpack.c.l.b16 %v1197
      %v1230 = vunpack.c.l.b16 %v1198
      %v1231 = vunpack.c.l.b16 %v1199
      %v1232 = vunpack.c.l.b16 %v1200
      %v1233 = vunpack.c.l.b16 %v1201
      %v1234 = vunpack.c.l.b16 %v1202
      %v1235 = vunpack.c.l.b16 %v1203
      %v1236 = vunpack.c.l.b16 %v1204
      %v1237 = vunpack.c.l.b16 %v1205
      %v1238 = vunpack.c.l.b16 %v1206
      %v1239 = vunpack.c.l.b16 %v1207
      %v1240 = vunpack.c.l.b16 %v1208
      %v1241 = vunpack.c.l.b16 %v1209
      %v1242 = vunpack.c.l.b16 %v1210
      %v1243 = vunpack.c.l.b16 %v1211
      %v1244 = vpack.c.b16 %v1229, %v1228
      %v1245 = vpack.c.b16 %v1231, %v1230
      %v1246 = vpack.c.b16 %v1233, %v1232
      %v1247 = vpack.c.b16 %v1235, %v1234
      %v1248 = vpack.c.b16 %v1237, %v1236
      %v1249 = vpack.c.b16 %v1239, %v1238
      %v1250 = vpack.c.b16 %v1241, %v1240
      %v1251 = vpack.c.b16 %v1243, %v1242
      %1260 = vmatprep.subr.bf16.mxu0 0
      %1261 = vmatpush1.bf16.msra.mxu0 %v1251
      %1262 = vmatprep.subr.bf16.mxu0 0
      %1263 = vmatpush1.bf16.msra.mxu0 %v1250
      %1264 = vmatprep.subr.bf16.mxu0 0
      %1265 = vmatpush1.bf16.msra.mxu0 %v1249
      %1266 = vmatprep.subr.bf16.mxu0 0
      %1267 = vmatpush1.bf16.msra.mxu0 %v1248
      %1268 = vmatprep.subr.bf16.mxu0 0
      %1269 = vmatpush1.bf16.msra.mxu0 %v1247
      %1270 = vmatprep.subr.bf16.mxu0 0
      %1271 = vmatpush1.bf16.msra.mxu0 %v1246
      %1272 = vmatprep.subr.bf16.mxu0 0
      %1273 = vmatpush1.bf16.msra.mxu0 %v1245
      %1274 = vmatprep.subr.bf16.mxu0 0
      %1275 = vmatpush1.bf16.msra.mxu0 %v1244
      %1276 = vmatprep.subr.bf16.mxu0 0
      %1277 = vmatpush2.bf16.msra.mxu0 0
      %1278 = vmatprep.subr.bf16.mxu0 0
      %1279 = vmatpush2.bf16.msra.mxu0 0
      %1280 = vmatprep.subr.bf16.mxu0 0
      %1281 = vmatpush2.bf16.msra.mxu0 0
      %1282 = vmatprep.subr.bf16.mxu0 0
      %1283 = vmatpush2.bf16.msra.mxu0 0
      %1284 = vmatprep.subr.bf16.mxu0 0
      %1285 = vmatpush2.bf16.msra.mxu0 0
      %1286 = vmatprep.subr.bf16.mxu0 0
      %1287 = vmatpush2.bf16.msra.mxu0 0
      %1288 = vmatprep.subr.bf16.mxu0 0
      %1289 = vmatpush2.bf16.msra.mxu0 0
      %1290 = vmatprep.subr.bf16.mxu0 0
      %1291 = vmatpush2.bf16.msra.mxu0 0
      %1292 = vmatprep.mubr.bf16.mxu0 0
      %1293 = vmatmul.mubr.bf16.gmra.mxu0 %v1194
      %v1294 = vpop.f32.mrf.mxu0
      %v1295 = vadd.f32 0.0, %v1294
      %v1296 = vpop.f32.mrf.mxu0
      %v1297 = vpop.f32.mrf.mxu0
      %v1298 = vadd.f32 0.0, %v1297
      %v1299 = vpop.f32.mrf.mxu0
      %1300 = vdwg.mxu0
      %1301 = vst [vmem:[%s172] sm:$0xff] %v1295
      %1302 = vst [vmem:[%s172 + $0x8] sm:$0xff] %v1298
      %s1303 = smul.u32 2, %s14
      %p1304 = scmp.lt.s32.totalorder %s1303, 3
      %s1305 = scalar_select %p1304, %s1303, 3
      %s1306 = smul.addr %s1305, 8
      %s1307 = scalar_lea.vmem %s3, %s1306
      // Predicated region
      $region33: #{simple_autoencoder_forward.1} parent=31 // pred_check
        %p1308 = pneg %p100
      $region34: #{simple_autoencoder_forward.1} parent=31 // pred_check_branch
        %1310 = sbr.rel (%p1308) target = $region36
      $region35: #{simple_autoencoder_forward.1} parent=31 // pred_region
        %s1311 = smul.u32 2, %s14
      $region36: #{simple_autoencoder_forward.1} parent=31 // pred_fallthru
        _
    $region32: #{simple_autoencoder_forward.1} parent=5 // pred_fallthru
      _
    %p1312 = scmp.le.s32.totalorder 2, %s9
    // Predicated region
    $region37: #{simple_autoencoder_forward.1} parent=5 // pred_check
      %p1313 = pneg %p1312
    $region38: #{simple_autoencoder_forward.1} parent=5 // pred_check_branch
      %1315 = sbr.rel (%p1313) target = $region40
    $region39: #{simple_autoencoder_forward.1} parent=5 // pred_region
      %s1316 = ssub.s32 %s9, 2
      // Predicated region
      $region41: #{simple_autoencoder_forward.1} parent=39 // pred_check
        %p1317 = pneg %p106
      $region42: #{simple_autoencoder_forward.1} parent=39 // pred_check_branch
        %1319 = sbr.rel (%p1317) target = $region44
      $region43: #{simple_autoencoder_forward.1} parent=39 // pred_region
        %s1320 = smul.u32 2, %s15
        %p1321 = scmp.lt.s32.totalorder %s1320, 3
        %s1322 = scalar_select %p1321, %s1320, 3
        %s1323 = smul.addr %s1322, 8
        %s1324 = scalar_lea.vmem %s3, %s1323
      $region44: #{simple_autoencoder_forward.1} parent=39 // pred_fallthru
        _
    $region40: #{simple_autoencoder_forward.1} parent=5 // pred_fallthru
      _
  $region6: #{simple_autoencoder_forward.1} parent=0 // loop_footer
    %s13 = sadd.s32 1, %s9
  $region7: #{simple_autoencoder_forward.1} parent=0 // loop_footer_branch
    %8 = sbr.rel target = $region3
  $region8: #{simple_autoencoder_forward.1} parent=0 // loop_exit
    _

</llo_original>
